<compile_context>
chip_gen: v6e
topology: v6e:2x2x1
jax: 0.10.0
libtpu: 0.0.40
codegen_flags: <defaults>
</compile_context>

<pallas_src>
import jax
import jax.numpy as jnp
from jax.experimental import pallas as pl
from jax.experimental.pallas import tpu as pltpu


def _action_encoder_kernel(x_ref, tab_ref, w1_ref, b1_ref, w2_ref, b2_ref,
                           o_ref, e_ref):
    """Fused gather + (Linear 7H->4H) + SiLU + (Linear 4H->H) for one batch tile.

    x_ref   : SMEM int32[Bp, 7]      (scalar-prefetched action codes)
    tab_ref : VMEM f32[7*257, H]     (embedding tables, position pre-folded)
    w1_ref  : VMEM bf16[7H, 4H]
    b1_ref  : VMEM f32[1, 4H]
    w2_ref  : VMEM bf16[4H, H]
    b2_ref  : VMEM f32[1, H]
    o_ref   : VMEM f32[TB, H]        (output tile)
    e_ref   : VMEM f32[TB, 7H]       (scratch: gathered+concatenated embeddings)
    """
    tb = o_ref.shape[0]
    h = o_ref.shape[1]
    row0 = pl.program_id(0) * tb

    # Fused embedding gather: dynamic sublane-indexed loads from the VMEM
    # table, written at static offsets into the per-tile scratch.
    for b in range(tb):
        for i in range(7):
            idx = x_ref[row0 + b, i] + i * 257
            e_ref[pl.ds(b, 1), pl.ds(i * h, h)] = tab_ref[pl.ds(idx, 1), :]

    # Linear(7H -> 4H) on the MXU: bf16 inputs, f32 accumulation.
    e = e_ref[...].astype(jnp.bfloat16)
    h1 = jnp.dot(e, w1_ref[...], preferred_element_type=jnp.float32)
    h1 = h1 + b1_ref[...]

    # SiLU in f32 (VPU + EUP).
    h1 = h1 * jax.nn.sigmoid(h1)

    # Linear(4H -> H).
    h2 = jnp.dot(h1.astype(jnp.bfloat16), w2_ref[...],
                 preferred_element_type=jnp.float32)
    o_ref[...] = (h2 + b2_ref[...]).astype(o_ref.dtype)


def action_encoder_forward(x, params, *, tile_b=8):
    """Forward pass equivalent to ActionEncoderWithLearnedPosition.forward.

    x: int32[B, 7] -> float32[B, H]
    """
    B = x.shape[0]
    H = params["pos_emb"].shape[1]

    # Fold the learned position embedding into the per-slot tables (identical
    # math) and concatenate the 7 tables into one (7*257, H) gather table.
    big_table = jnp.concatenate(
        [params["emb_tables"][i] + params["pos_emb"][i][None, :]
         for i in range(7)], axis=0).astype(jnp.float32)          # (1799, H)

    # bf16 weights for the MXU; biases stay f32 (added to f32 accumulators).
    w1 = params["w1"].astype(jnp.bfloat16)                        # (7H, 4H)
    w2 = params["w2"].astype(jnp.bfloat16)                        # (4H, H)
    b1 = params["b1"].reshape(1, 4 * H).astype(jnp.float32)
    b2 = params["b2"].reshape(1, H).astype(jnp.float32)

    # Pad batch up to a multiple of the tile (row index 0 is a valid lookup).
    nb = -(-B // tile_b)
    Bp = nb * tile_b
    if Bp != B:
        x = jnp.pad(x, ((0, Bp - B), (0, 0)))

    flops = 2 * Bp * (7 * H) * (4 * H) + 2 * Bp * (4 * H) * H
    bytes_accessed = (x.size * 4 + big_table.size * 4 + w1.size * 2 +
                      w2.size * 2 + b1.size * 4 + b2.size * 4 + Bp * H * 4)
    cost = pl.CostEstimate(flops=flops,
                           transcendentals=Bp * 4 * H,
                           bytes_accessed=bytes_accessed)

    # NOTE: for very large H the (7H, 4H) weight should be streamed/tiled over
    # its N dimension instead of held whole (v7x has only 64 MiB VMEM); at the
    # sizes used here full-block residency is a few hundred KiB.
    grid_spec = pltpu.PrefetchScalarGridSpec(
        num_scalar_prefetch=1,                   # x -> SMEM, fed to index_maps
        grid=(nb,),
        in_specs=[
            pl.BlockSpec((7 * 257, H), lambda i, xs: (0, 0)),   # table
            pl.BlockSpec((7 * H, 4 * H), lambda i, xs: (0, 0)),  # W1
            pl.BlockSpec((1, 4 * H), lambda i, xs: (0, 0)),      # b1
            pl.BlockSpec((4 * H, H), lambda i, xs: (0, 0)),      # W2
            pl.BlockSpec((1, H), lambda i, xs: (0, 0)),          # b2
        ],
        out_specs=pl.BlockSpec((tile_b, H), lambda i, xs: (i, 0)),
        scratch_shapes=[pltpu.VMEM((tile_b, 7 * H), jnp.float32)],
    )

    out = pl.pallas_call(
        _action_encoder_kernel,
        out_shape=jax.ShapeDtypeStruct((Bp, H), jnp.float32),
        grid_spec=grid_spec,
        compiler_params=pltpu.CompilerParams(
            dimension_semantics=("parallel",),
            vmem_limit_bytes=64 * 1024 * 1024,
        ),
        cost_estimate=cost,
    )(x, big_table, w1, b1, w2, b2)

    return out[:B]


def init_params(key, hidden_size):
    """Deterministic synthetic parameters matching the PyTorch module shapes."""
    ks = jax.random.split(key, 11)
    emb_tables = [
        jax.random.normal(ks[i], (257, hidden_size), jnp.float32) * 0.02
        for i in range(7)
    ]
    pos_emb = jax.random.normal(ks[7], (7, hidden_size), jnp.float32) * 0.02
    w1 = jax.random.normal(ks[8], (7 * hidden_size, 4 * hidden_size),
                           jnp.float32) * 0.02
    b1 = jnp.zeros((4 * hidden_size,), jnp.float32)
    w2 = jax.random.normal(ks[9], (4 * hidden_size, hidden_size),
                           jnp.float32) * 0.02
    b2 = jnp.zeros((hidden_size,), jnp.float32)
    return {
        "emb_tables": emb_tables,
        "pos_emb": pos_emb,
        "w1": w1,
        "b1": b1,
        "w2": w2,
        "b2": b2,
    }


def reference_forward(x, params):
    """Pure-JAX f32 reference mirroring the PyTorch forward exactly."""
    B = x.shape[0]
    H = params["pos_emb"].shape[1]
    embedded = [params["emb_tables"][i][x[:, i]] for i in range(7)]
    e = jnp.stack(embedded, axis=1) + params["pos_emb"][None, :, :]
    e = e.reshape(B, 7 * H)
    h = e @ params["w1"] + params["b1"]
    h = h * jax.nn.sigmoid(h)
    return h @ params["w2"] + params["b2"]


if __name__ == "__main__":
    key = jax.random.PRNGKey(0)
    k_param, k_x = jax.random.split(key)

    hidden_size = 32
    batch = 12            # exercises batch tiling + padding (2 grid steps)

    params = init_params(k_param, hidden_size)
    x = jax.random.randint(k_x, (batch, 7), 0, 257, dtype=jnp.int32)

    out = jax.block_until_ready(action_encoder_forward(x, params))

    ref = reference_forward(x, params)
    assert out.shape == (batch, hidden_size)
    # bf16 matmul inputs (f32 accumulation) => small, bounded deviation vs f32.
    assert jnp.allclose(out, ref, atol=2e-3, rtol=2e-2), "mismatch vs reference"

    print("KERNEL_OK")
</pallas_src>

<mosaic_0001>
module attributes {stable_mosaic.version = 11 : i64} {
  func.func @_action_encoder_kernel(%arg0: i32, %arg1: memref<16x7xi32, #tpu.memory_space<smem>>, %arg2: memref<1799x32xf32, #tpu.memory_space<vmem>>, %arg3: memref<224x128xbf16, #tpu.memory_space<vmem>>, %arg4: memref<1x128xf32, #tpu.memory_space<vmem>>, %arg5: memref<128x32xbf16, #tpu.memory_space<vmem>>, %arg6: memref<1x32xf32, #tpu.memory_space<vmem>>, %arg7: memref<8x32xf32, #tpu.memory_space<vmem>>, %arg8: memref<8x224xf32, #tpu.memory_space<vmem>>) attributes {dimension_semantics = [#tpu.dimension_semantics<parallel>], iteration_bounds = array<i64: 2>, scalar_prefetch = 1 : i64, scratch_operands = 1 : i64, tpu.core_type = #tpu.core_type<tc>, window_params = [{pipeline_mode = #tpu.pipeline_mode<synchronous>, transform_indices = @transform_0, window_bounds = array<i64: 1799, 32>}, {pipeline_mode = #tpu.pipeline_mode<synchronous>, transform_indices = @transform_1, window_bounds = array<i64: 224, 128>}, {pipeline_mode = #tpu.pipeline_mode<synchronous>, transform_indices = @transform_2, window_bounds = array<i64: 1, 128>}, {pipeline_mode = #tpu.pipeline_mode<synchronous>, transform_indices = @transform_3, window_bounds = array<i64: 128, 32>}, {pipeline_mode = #tpu.pipeline_mode<synchronous>, transform_indices = @transform_4, window_bounds = array<i64: 1, 32>}, {transform_indices = @transform_5, window_bounds = array<i64: 8, 32>}]} {
    %c8_i32 = arith.constant 8 : i32
    %0 = arith.muli %arg0, %c8_i32 : i32
    %c0_i32 = arith.constant 0 : i32
    %1 = arith.addi %0, %c0_i32 : i32
    %2 = arith.index_cast %1 : i32 to index
    %c0 = arith.constant 0 : index
    %3 = memref.load %arg1[%2, %c0] : memref<16x7xi32, #tpu.memory_space<smem>>
    %c0_i32_0 = arith.constant 0 : i32
    %4 = arith.addi %3, %c0_i32_0 : i32
    %5 = arith.index_cast %4 : i32 to index
    %c0_1 = arith.constant 0 : index
    %6 = vector.load %arg2[%5, %c0_1] : memref<1799x32xf32, #tpu.memory_space<vmem>>, vector<1x32xf32>
    %c0_2 = arith.constant 0 : index
    %c0_3 = arith.constant 0 : index
    %7 = vector.load %arg8[%c0_2, %c0_3] : memref<8x224xf32, #tpu.memory_space<vmem>>, vector<1x32xf32>
    tpu.vector_store %arg8[%c0_2, %c0_3], %6 {strides = array<i32>} : memref<8x224xf32, #tpu.memory_space<vmem>>, vector<1x32xf32>,
    %c0_i32_4 = arith.constant 0 : i32
    %8 = arith.addi %0, %c0_i32_4 : i32
    %9 = arith.index_cast %8 : i32 to index
    %c1 = arith.constant 1 : index
    %10 = memref.load %arg1[%9, %c1] : memref<16x7xi32, #tpu.memory_space<smem>>
    %c257_i32 = arith.constant 257 : i32
    %11 = arith.addi %10, %c257_i32 : i32
    %12 = arith.index_cast %11 : i32 to index
    %c0_5 = arith.constant 0 : index
    %13 = vector.load %arg2[%12, %c0_5] : memref<1799x32xf32, #tpu.memory_space<vmem>>, vector<1x32xf32>
    %c0_6 = arith.constant 0 : index
    %c32 = arith.constant 32 : index
    %14 = vector.load %arg8[%c0_6, %c32] : memref<8x224xf32, #tpu.memory_space<vmem>>, vector<1x32xf32>
    tpu.vector_store %arg8[%c0_6, %c32], %13 {strides = array<i32>} : memref<8x224xf32, #tpu.memory_space<vmem>>, vector<1x32xf32>,
    %c0_i32_7 = arith.constant 0 : i32
    %15 = arith.addi %0, %c0_i32_7 : i32
    %16 = arith.index_cast %15 : i32 to index
    %c2 = arith.constant 2 : index
    %17 = memref.load %arg1[%16, %c2] : memref<16x7xi32, #tpu.memory_space<smem>>
    %c514_i32 = arith.constant 514 : i32
    %18 = arith.addi %17, %c514_i32 : i32
    %19 = arith.index_cast %18 : i32 to index
    %c0_8 = arith.constant 0 : index
    %20 = vector.load %arg2[%19, %c0_8] : memref<1799x32xf32, #tpu.memory_space<vmem>>, vector<1x32xf32>
    %c0_9 = arith.constant 0 : index
    %c64 = arith.constant 64 : index
    %21 = vector.load %arg8[%c0_9, %c64] : memref<8x224xf32, #tpu.memory_space<vmem>>, vector<1x32xf32>
    tpu.vector_store %arg8[%c0_9, %c64], %20 {strides = array<i32>} : memref<8x224xf32, #tpu.memory_space<vmem>>, vector<1x32xf32>,
    %c0_i32_10 = arith.constant 0 : i32
    %22 = arith.addi %0, %c0_i32_10 : i32
    %23 = arith.index_cast %22 : i32 to index
    %c3 = arith.constant 3 : index
    %24 = memref.load %arg1[%23, %c3] : memref<16x7xi32, #tpu.memory_space<smem>>
    %c771_i32 = arith.constant 771 : i32
    %25 = arith.addi %24, %c771_i32 : i32
    %26 = arith.index_cast %25 : i32 to index
    %c0_11 = arith.constant 0 : index
    %27 = vector.load %arg2[%26, %c0_11] : memref<1799x32xf32, #tpu.memory_space<vmem>>, vector<1x32xf32>
    %c0_12 = arith.constant 0 : index
    %c96 = arith.constant 96 : index
    %28 = vector.load %arg8[%c0_12, %c96] : memref<8x224xf32, #tpu.memory_space<vmem>>, vector<1x32xf32>
    tpu.vector_store %arg8[%c0_12, %c96], %27 {strides = array<i32>} : memref<8x224xf32, #tpu.memory_space<vmem>>, vector<1x32xf32>,
    %c0_i32_13 = arith.constant 0 : i32
    %29 = arith.addi %0, %c0_i32_13 : i32
    %30 = arith.index_cast %29 : i32 to index
    %c4 = arith.constant 4 : index
    %31 = memref.load %arg1[%30, %c4] : memref<16x7xi32, #tpu.memory_space<smem>>
    %c1028_i32 = arith.constant 1028 : i32
    %32 = arith.addi %31, %c1028_i32 : i32
    %33 = arith.index_cast %32 : i32 to index
    %c0_14 = arith.constant 0 : index
    %34 = vector.load %arg2[%33, %c0_14] : memref<1799x32xf32, #tpu.memory_space<vmem>>, vector<1x32xf32>
    %c0_15 = arith.constant 0 : index
    %c128 = arith.constant 128 : index
    %35 = vector.load %arg8[%c0_15, %c128] : memref<8x224xf32, #tpu.memory_space<vmem>>, vector<1x32xf32>
    tpu.vector_store %arg8[%c0_15, %c128], %34 {strides = array<i32>} : memref<8x224xf32, #tpu.memory_space<vmem>>, vector<1x32xf32>,
    %c0_i32_16 = arith.constant 0 : i32
    %36 = arith.addi %0, %c0_i32_16 : i32
    %37 = arith.index_cast %36 : i32 to index
    %c5 = arith.constant 5 : index
    %38 = memref.load %arg1[%37, %c5] : memref<16x7xi32, #tpu.memory_space<smem>>
    %c1285_i32 = arith.constant 1285 : i32
    %39 = arith.addi %38, %c1285_i32 : i32
    %40 = arith.index_cast %39 : i32 to index
    %c0_17 = arith.constant 0 : index
    %41 = vector.load %arg2[%40, %c0_17] : memref<1799x32xf32, #tpu.memory_space<vmem>>, vector<1x32xf32>
    %c0_18 = arith.constant 0 : index
    %c160 = arith.constant 160 : index
    %42 = vector.load %arg8[%c0_18, %c160] : memref<8x224xf32, #tpu.memory_space<vmem>>, vector<1x32xf32>
    tpu.vector_store %arg8[%c0_18, %c160], %41 {strides = array<i32>} : memref<8x224xf32, #tpu.memory_space<vmem>>, vector<1x32xf32>,
    %c0_i32_19 = arith.constant 0 : i32
    %43 = arith.addi %0, %c0_i32_19 : i32
    %44 = arith.index_cast %43 : i32 to index
    %c6 = arith.constant 6 : index
    %45 = memref.load %arg1[%44, %c6] : memref<16x7xi32, #tpu.memory_space<smem>>
    %c1542_i32 = arith.constant 1542 : i32
    %46 = arith.addi %45, %c1542_i32 : i32
    %47 = arith.index_cast %46 : i32 to index
    %c0_20 = arith.constant 0 : index
    %48 = vector.load %arg2[%47, %c0_20] : memref<1799x32xf32, #tpu.memory_space<vmem>>, vector<1x32xf32>
    %c0_21 = arith.constant 0 : index
    %c192 = arith.constant 192 : index
    %49 = vector.load %arg8[%c0_21, %c192] : memref<8x224xf32, #tpu.memory_space<vmem>>, vector<1x32xf32>
    tpu.vector_store %arg8[%c0_21, %c192], %48 {strides = array<i32>} : memref<8x224xf32, #tpu.memory_space<vmem>>, vector<1x32xf32>,
    %c1_i32 = arith.constant 1 : i32
    %50 = arith.addi %0, %c1_i32 : i32
    %51 = arith.index_cast %50 : i32 to index
    %c0_22 = arith.constant 0 : index
    %52 = memref.load %arg1[%51, %c0_22] : memref<16x7xi32, #tpu.memory_space<smem>>
    %c0_i32_23 = arith.constant 0 : i32
    %53 = arith.addi %52, %c0_i32_23 : i32
    %54 = arith.index_cast %53 : i32 to index
    %c0_24 = arith.constant 0 : index
    %55 = vector.load %arg2[%54, %c0_24] : memref<1799x32xf32, #tpu.memory_space<vmem>>, vector<1x32xf32>
    %c1_25 = arith.constant 1 : index
    %c0_26 = arith.constant 0 : index
    %56 = vector.load %arg8[%c1_25, %c0_26] : memref<8x224xf32, #tpu.memory_space<vmem>>, vector<1x32xf32>
    tpu.vector_store %arg8[%c1_25, %c0_26], %55 {strides = array<i32>} : memref<8x224xf32, #tpu.memory_space<vmem>>, vector<1x32xf32>,
    %c1_i32_27 = arith.constant 1 : i32
    %57 = arith.addi %0, %c1_i32_27 : i32
    %58 = arith.index_cast %57 : i32 to index
    %c1_28 = arith.constant 1 : index
    %59 = memref.load %arg1[%58, %c1_28] : memref<16x7xi32, #tpu.memory_space<smem>>
    %c257_i32_29 = arith.constant 257 : i32
    %60 = arith.addi %59, %c257_i32_29 : i32
    %61 = arith.index_cast %60 : i32 to index
    %c0_30 = arith.constant 0 : index
    %62 = vector.load %arg2[%61, %c0_30] : memref<1799x32xf32, #tpu.memory_space<vmem>>, vector<1x32xf32>
    %c1_31 = arith.constant 1 : index
    %c32_32 = arith.constant 32 : index
    %63 = vector.load %arg8[%c1_31, %c32_32] : memref<8x224xf32, #tpu.memory_space<vmem>>, vector<1x32xf32>
    tpu.vector_store %arg8[%c1_31, %c32_32], %62 {strides = array<i32>} : memref<8x224xf32, #tpu.memory_space<vmem>>, vector<1x32xf32>,
    %c1_i32_33 = arith.constant 1 : i32
    %64 = arith.addi %0, %c1_i32_33 : i32
    %65 = arith.index_cast %64 : i32 to index
    %c2_34 = arith.constant 2 : index
    %66 = memref.load %arg1[%65, %c2_34] : memref<16x7xi32, #tpu.memory_space<smem>>
    %c514_i32_35 = arith.constant 514 : i32
    %67 = arith.addi %66, %c514_i32_35 : i32
    %68 = arith.index_cast %67 : i32 to index
    %c0_36 = arith.constant 0 : index
    %69 = vector.load %arg2[%68, %c0_36] : memref<1799x32xf32, #tpu.memory_space<vmem>>, vector<1x32xf32>
    %c1_37 = arith.constant 1 : index
    %c64_38 = arith.constant 64 : index
    %70 = vector.load %arg8[%c1_37, %c64_38] : memref<8x224xf32, #tpu.memory_space<vmem>>, vector<1x32xf32>
    tpu.vector_store %arg8[%c1_37, %c64_38], %69 {strides = array<i32>} : memref<8x224xf32, #tpu.memory_space<vmem>>, vector<1x32xf32>,
    %c1_i32_39 = arith.constant 1 : i32
    %71 = arith.addi %0, %c1_i32_39 : i32
    %72 = arith.index_cast %71 : i32 to index
    %c3_40 = arith.constant 3 : index
    %73 = memref.load %arg1[%72, %c3_40] : memref<16x7xi32, #tpu.memory_space<smem>>
    %c771_i32_41 = arith.constant 771 : i32
    %74 = arith.addi %73, %c771_i32_41 : i32
    %75 = arith.index_cast %74 : i32 to index
    %c0_42 = arith.constant 0 : index
    %76 = vector.load %arg2[%75, %c0_42] : memref<1799x32xf32, #tpu.memory_space<vmem>>, vector<1x32xf32>
    %c1_43 = arith.constant 1 : index
    %c96_44 = arith.constant 96 : index
    %77 = vector.load %arg8[%c1_43, %c96_44] : memref<8x224xf32, #tpu.memory_space<vmem>>, vector<1x32xf32>
    tpu.vector_store %arg8[%c1_43, %c96_44], %76 {strides = array<i32>} : memref<8x224xf32, #tpu.memory_space<vmem>>, vector<1x32xf32>,
    %c1_i32_45 = arith.constant 1 : i32
    %78 = arith.addi %0, %c1_i32_45 : i32
    %79 = arith.index_cast %78 : i32 to index
    %c4_46 = arith.constant 4 : index
    %80 = memref.load %arg1[%79, %c4_46] : memref<16x7xi32, #tpu.memory_space<smem>>
    %c1028_i32_47 = arith.constant 1028 : i32
    %81 = arith.addi %80, %c1028_i32_47 : i32
    %82 = arith.index_cast %81 : i32 to index
    %c0_48 = arith.constant 0 : index
    %83 = vector.load %arg2[%82, %c0_48] : memref<1799x32xf32, #tpu.memory_space<vmem>>, vector<1x32xf32>
    %c1_49 = arith.constant 1 : index
    %c128_50 = arith.constant 128 : index
    %84 = vector.load %arg8[%c1_49, %c128_50] : memref<8x224xf32, #tpu.memory_space<vmem>>, vector<1x32xf32>
    tpu.vector_store %arg8[%c1_49, %c128_50], %83 {strides = array<i32>} : memref<8x224xf32, #tpu.memory_space<vmem>>, vector<1x32xf32>,
    %c1_i32_51 = arith.constant 1 : i32
    %85 = arith.addi %0, %c1_i32_51 : i32
    %86 = arith.index_cast %85 : i32 to index
    %c5_52 = arith.constant 5 : index
    %87 = memref.load %arg1[%86, %c5_52] : memref<16x7xi32, #tpu.memory_space<smem>>
    %c1285_i32_53 = arith.constant 1285 : i32
    %88 = arith.addi %87, %c1285_i32_53 : i32
    %89 = arith.index_cast %88 : i32 to index
    %c0_54 = arith.constant 0 : index
    %90 = vector.load %arg2[%89, %c0_54] : memref<1799x32xf32, #tpu.memory_space<vmem>>, vector<1x32xf32>
    %c1_55 = arith.constant 1 : index
    %c160_56 = arith.constant 160 : index
    %91 = vector.load %arg8[%c1_55, %c160_56] : memref<8x224xf32, #tpu.memory_space<vmem>>, vector<1x32xf32>
    tpu.vector_store %arg8[%c1_55, %c160_56], %90 {strides = array<i32>} : memref<8x224xf32, #tpu.memory_space<vmem>>, vector<1x32xf32>,
    %c1_i32_57 = arith.constant 1 : i32
    %92 = arith.addi %0, %c1_i32_57 : i32
    %93 = arith.index_cast %92 : i32 to index
    %c6_58 = arith.constant 6 : index
    %94 = memref.load %arg1[%93, %c6_58] : memref<16x7xi32, #tpu.memory_space<smem>>
    %c1542_i32_59 = arith.constant 1542 : i32
    %95 = arith.addi %94, %c1542_i32_59 : i32
    %96 = arith.index_cast %95 : i32 to index
    %c0_60 = arith.constant 0 : index
    %97 = vector.load %arg2[%96, %c0_60] : memref<1799x32xf32, #tpu.memory_space<vmem>>, vector<1x32xf32>
    %c1_61 = arith.constant 1 : index
    %c192_62 = arith.constant 192 : index
    %98 = vector.load %arg8[%c1_61, %c192_62] : memref<8x224xf32, #tpu.memory_space<vmem>>, vector<1x32xf32>
    tpu.vector_store %arg8[%c1_61, %c192_62], %97 {strides = array<i32>} : memref<8x224xf32, #tpu.memory_space<vmem>>, vector<1x32xf32>,
    %c2_i32 = arith.constant 2 : i32
    %99 = arith.addi %0, %c2_i32 : i32
    %100 = arith.index_cast %99 : i32 to index
    %c0_63 = arith.constant 0 : index
    %101 = memref.load %arg1[%100, %c0_63] : memref<16x7xi32, #tpu.memory_space<smem>>
    %c0_i32_64 = arith.constant 0 : i32
    %102 = arith.addi %101, %c0_i32_64 : i32
    %103 = arith.index_cast %102 : i32 to index
    %c0_65 = arith.constant 0 : index
    %104 = vector.load %arg2[%103, %c0_65] : memref<1799x32xf32, #tpu.memory_space<vmem>>, vector<1x32xf32>
    %c2_66 = arith.constant 2 : index
    %c0_67 = arith.constant 0 : index
    %105 = vector.load %arg8[%c2_66, %c0_67] : memref<8x224xf32, #tpu.memory_space<vmem>>, vector<1x32xf32>
    tpu.vector_store %arg8[%c2_66, %c0_67], %104 {strides = array<i32>} : memref<8x224xf32, #tpu.memory_space<vmem>>, vector<1x32xf32>,
    %c2_i32_68 = arith.constant 2 : i32
    %106 = arith.addi %0, %c2_i32_68 : i32
    %107 = arith.index_cast %106 : i32 to index
    %c1_69 = arith.constant 1 : index
    %108 = memref.load %arg1[%107, %c1_69] : memref<16x7xi32, #tpu.memory_space<smem>>
    %c257_i32_70 = arith.constant 257 : i32
    %109 = arith.addi %108, %c257_i32_70 : i32
    %110 = arith.index_cast %109 : i32 to index
    %c0_71 = arith.constant 0 : index
    %111 = vector.load %arg2[%110, %c0_71] : memref<1799x32xf32, #tpu.memory_space<vmem>>, vector<1x32xf32>
    %c2_72 = arith.constant 2 : index
    %c32_73 = arith.constant 32 : index
    %112 = vector.load %arg8[%c2_72, %c32_73] : memref<8x224xf32, #tpu.memory_space<vmem>>, vector<1x32xf32>
    tpu.vector_store %arg8[%c2_72, %c32_73], %111 {strides = array<i32>} : memref<8x224xf32, #tpu.memory_space<vmem>>, vector<1x32xf32>,
    %c2_i32_74 = arith.constant 2 : i32
    %113 = arith.addi %0, %c2_i32_74 : i32
    %114 = arith.index_cast %113 : i32 to index
    %c2_75 = arith.constant 2 : index
    %115 = memref.load %arg1[%114, %c2_75] : memref<16x7xi32, #tpu.memory_space<smem>>
    %c514_i32_76 = arith.constant 514 : i32
    %116 = arith.addi %115, %c514_i32_76 : i32
    %117 = arith.index_cast %116 : i32 to index
    %c0_77 = arith.constant 0 : index
    %118 = vector.load %arg2[%117, %c0_77] : memref<1799x32xf32, #tpu.memory_space<vmem>>, vector<1x32xf32>
    %c2_78 = arith.constant 2 : index
    %c64_79 = arith.constant 64 : index
    %119 = vector.load %arg8[%c2_78, %c64_79] : memref<8x224xf32, #tpu.memory_space<vmem>>, vector<1x32xf32>
    tpu.vector_store %arg8[%c2_78, %c64_79], %118 {strides = array<i32>} : memref<8x224xf32, #tpu.memory_space<vmem>>, vector<1x32xf32>,
    %c2_i32_80 = arith.constant 2 : i32
    %120 = arith.addi %0, %c2_i32_80 : i32
    %121 = arith.index_cast %120 : i32 to index
    %c3_81 = arith.constant 3 : index
    %122 = memref.load %arg1[%121, %c3_81] : memref<16x7xi32, #tpu.memory_space<smem>>
    %c771_i32_82 = arith.constant 771 : i32
    %123 = arith.addi %122, %c771_i32_82 : i32
    %124 = arith.index_cast %123 : i32 to index
    %c0_83 = arith.constant 0 : index
    %125 = vector.load %arg2[%124, %c0_83] : memref<1799x32xf32, #tpu.memory_space<vmem>>, vector<1x32xf32>
    %c2_84 = arith.constant 2 : index
    %c96_85 = arith.constant 96 : index
    %126 = vector.load %arg8[%c2_84, %c96_85] : memref<8x224xf32, #tpu.memory_space<vmem>>, vector<1x32xf32>
    tpu.vector_store %arg8[%c2_84, %c96_85], %125 {strides = array<i32>} : memref<8x224xf32, #tpu.memory_space<vmem>>, vector<1x32xf32>,
    %c2_i32_86 = arith.constant 2 : i32
    %127 = arith.addi %0, %c2_i32_86 : i32
    %128 = arith.index_cast %127 : i32 to index
    %c4_87 = arith.constant 4 : index
    %129 = memref.load %arg1[%128, %c4_87] : memref<16x7xi32, #tpu.memory_space<smem>>
    %c1028_i32_88 = arith.constant 1028 : i32
    %130 = arith.addi %129, %c1028_i32_88 : i32
    %131 = arith.index_cast %130 : i32 to index
    %c0_89 = arith.constant 0 : index
    %132 = vector.load %arg2[%131, %c0_89] : memref<1799x32xf32, #tpu.memory_space<vmem>>, vector<1x32xf32>
    %c2_90 = arith.constant 2 : index
    %c128_91 = arith.constant 128 : index
    %133 = vector.load %arg8[%c2_90, %c128_91] : memref<8x224xf32, #tpu.memory_space<vmem>>, vector<1x32xf32>
    tpu.vector_store %arg8[%c2_90, %c128_91], %132 {strides = array<i32>} : memref<8x224xf32, #tpu.memory_space<vmem>>, vector<1x32xf32>,
    %c2_i32_92 = arith.constant 2 : i32
    %134 = arith.addi %0, %c2_i32_92 : i32
    %135 = arith.index_cast %134 : i32 to index
    %c5_93 = arith.constant 5 : index
    %136 = memref.load %arg1[%135, %c5_93] : memref<16x7xi32, #tpu.memory_space<smem>>
    %c1285_i32_94 = arith.constant 1285 : i32
    %137 = arith.addi %136, %c1285_i32_94 : i32
    %138 = arith.index_cast %137 : i32 to index
    %c0_95 = arith.constant 0 : index
    %139 = vector.load %arg2[%138, %c0_95] : memref<1799x32xf32, #tpu.memory_space<vmem>>, vector<1x32xf32>
    %c2_96 = arith.constant 2 : index
    %c160_97 = arith.constant 160 : index
    %140 = vector.load %arg8[%c2_96, %c160_97] : memref<8x224xf32, #tpu.memory_space<vmem>>, vector<1x32xf32>
    tpu.vector_store %arg8[%c2_96, %c160_97], %139 {strides = array<i32>} : memref<8x224xf32, #tpu.memory_space<vmem>>, vector<1x32xf32>,
    %c2_i32_98 = arith.constant 2 : i32
    %141 = arith.addi %0, %c2_i32_98 : i32
    %142 = arith.index_cast %141 : i32 to index
    %c6_99 = arith.constant 6 : index
    %143 = memref.load %arg1[%142, %c6_99] : memref<16x7xi32, #tpu.memory_space<smem>>
    %c1542_i32_100 = arith.constant 1542 : i32
    %144 = arith.addi %143, %c1542_i32_100 : i32
    %145 = arith.index_cast %144 : i32 to index
    %c0_101 = arith.constant 0 : index
    %146 = vector.load %arg2[%145, %c0_101] : memref<1799x32xf32, #tpu.memory_space<vmem>>, vector<1x32xf32>
    %c2_102 = arith.constant 2 : index
    %c192_103 = arith.constant 192 : index
    %147 = vector.load %arg8[%c2_102, %c192_103] : memref<8x224xf32, #tpu.memory_space<vmem>>, vector<1x32xf32>
    tpu.vector_store %arg8[%c2_102, %c192_103], %146 {strides = array<i32>} : memref<8x224xf32, #tpu.memory_space<vmem>>, vector<1x32xf32>,
    %c3_i32 = arith.constant 3 : i32
    %148 = arith.addi %0, %c3_i32 : i32
    %149 = arith.index_cast %148 : i32 to index
    %c0_104 = arith.constant 0 : index
    %150 = memref.load %arg1[%149, %c0_104] : memref<16x7xi32, #tpu.memory_space<smem>>
    %c0_i32_105 = arith.constant 0 : i32
    %151 = arith.addi %150, %c0_i32_105 : i32
    %152 = arith.index_cast %151 : i32 to index
    %c0_106 = arith.constant 0 : index
    %153 = vector.load %arg2[%152, %c0_106] : memref<1799x32xf32, #tpu.memory_space<vmem>>, vector<1x32xf32>
    %c3_107 = arith.constant 3 : index
    %c0_108 = arith.constant 0 : index
    %154 = vector.load %arg8[%c3_107, %c0_108] : memref<8x224xf32, #tpu.memory_space<vmem>>, vector<1x32xf32>
    tpu.vector_store %arg8[%c3_107, %c0_108], %153 {strides = array<i32>} : memref<8x224xf32, #tpu.memory_space<vmem>>, vector<1x32xf32>,
    %c3_i32_109 = arith.constant 3 : i32
    %155 = arith.addi %0, %c3_i32_109 : i32
    %156 = arith.index_cast %155 : i32 to index
    %c1_110 = arith.constant 1 : index
    %157 = memref.load %arg1[%156, %c1_110] : memref<16x7xi32, #tpu.memory_space<smem>>
    %c257_i32_111 = arith.constant 257 : i32
    %158 = arith.addi %157, %c257_i32_111 : i32
    %159 = arith.index_cast %158 : i32 to index
    %c0_112 = arith.constant 0 : index
    %160 = vector.load %arg2[%159, %c0_112] : memref<1799x32xf32, #tpu.memory_space<vmem>>, vector<1x32xf32>
    %c3_113 = arith.constant 3 : index
    %c32_114 = arith.constant 32 : index
    %161 = vector.load %arg8[%c3_113, %c32_114] : memref<8x224xf32, #tpu.memory_space<vmem>>, vector<1x32xf32>
    tpu.vector_store %arg8[%c3_113, %c32_114], %160 {strides = array<i32>} : memref<8x224xf32, #tpu.memory_space<vmem>>, vector<1x32xf32>,
    %c3_i32_115 = arith.constant 3 : i32
    %162 = arith.addi %0, %c3_i32_115 : i32
    %163 = arith.index_cast %162 : i32 to index
    %c2_116 = arith.constant 2 : index
    %164 = memref.load %arg1[%163, %c2_116] : memref<16x7xi32, #tpu.memory_space<smem>>
    %c514_i32_117 = arith.constant 514 : i32
    %165 = arith.addi %164, %c514_i32_117 : i32
    %166 = arith.index_cast %165 : i32 to index
    %c0_118 = arith.constant 0 : index
    %167 = vector.load %arg2[%166, %c0_118] : memref<1799x32xf32, #tpu.memory_space<vmem>>, vector<1x32xf32>
    %c3_119 = arith.constant 3 : index
    %c64_120 = arith.constant 64 : index
    %168 = vector.load %arg8[%c3_119, %c64_120] : memref<8x224xf32, #tpu.memory_space<vmem>>, vector<1x32xf32>
    tpu.vector_store %arg8[%c3_119, %c64_120], %167 {strides = array<i32>} : memref<8x224xf32, #tpu.memory_space<vmem>>, vector<1x32xf32>,
    %c3_i32_121 = arith.constant 3 : i32
    %169 = arith.addi %0, %c3_i32_121 : i32
    %170 = arith.index_cast %169 : i32 to index
    %c3_122 = arith.constant 3 : index
    %171 = memref.load %arg1[%170, %c3_122] : memref<16x7xi32, #tpu.memory_space<smem>>
    %c771_i32_123 = arith.constant 771 : i32
    %172 = arith.addi %171, %c771_i32_123 : i32
    %173 = arith.index_cast %172 : i32 to index
    %c0_124 = arith.constant 0 : index
    %174 = vector.load %arg2[%173, %c0_124] : memref<1799x32xf32, #tpu.memory_space<vmem>>, vector<1x32xf32>
    %c3_125 = arith.constant 3 : index
    %c96_126 = arith.constant 96 : index
    %175 = vector.load %arg8[%c3_125, %c96_126] : memref<8x224xf32, #tpu.memory_space<vmem>>, vector<1x32xf32>
    tpu.vector_store %arg8[%c3_125, %c96_126], %174 {strides = array<i32>} : memref<8x224xf32, #tpu.memory_space<vmem>>, vector<1x32xf32>,
    %c3_i32_127 = arith.constant 3 : i32
    %176 = arith.addi %0, %c3_i32_127 : i32
    %177 = arith.index_cast %176 : i32 to index
    %c4_128 = arith.constant 4 : index
    %178 = memref.load %arg1[%177, %c4_128] : memref<16x7xi32, #tpu.memory_space<smem>>
    %c1028_i32_129 = arith.constant 1028 : i32
    %179 = arith.addi %178, %c1028_i32_129 : i32
    %180 = arith.index_cast %179 : i32 to index
    %c0_130 = arith.constant 0 : index
    %181 = vector.load %arg2[%180, %c0_130] : memref<1799x32xf32, #tpu.memory_space<vmem>>, vector<1x32xf32>
    %c3_131 = arith.constant 3 : index
    %c128_132 = arith.constant 128 : index
    %182 = vector.load %arg8[%c3_131, %c128_132] : memref<8x224xf32, #tpu.memory_space<vmem>>, vector<1x32xf32>
    tpu.vector_store %arg8[%c3_131, %c128_132], %181 {strides = array<i32>} : memref<8x224xf32, #tpu.memory_space<vmem>>, vector<1x32xf32>,
    %c3_i32_133 = arith.constant 3 : i32
    %183 = arith.addi %0, %c3_i32_133 : i32
    %184 = arith.index_cast %183 : i32 to index
    %c5_134 = arith.constant 5 : index
    %185 = memref.load %arg1[%184, %c5_134] : memref<16x7xi32, #tpu.memory_space<smem>>
    %c1285_i32_135 = arith.constant 1285 : i32
    %186 = arith.addi %185, %c1285_i32_135 : i32
    %187 = arith.index_cast %186 : i32 to index
    %c0_136 = arith.constant 0 : index
    %188 = vector.load %arg2[%187, %c0_136] : memref<1799x32xf32, #tpu.memory_space<vmem>>, vector<1x32xf32>
    %c3_137 = arith.constant 3 : index
    %c160_138 = arith.constant 160 : index
    %189 = vector.load %arg8[%c3_137, %c160_138] : memref<8x224xf32, #tpu.memory_space<vmem>>, vector<1x32xf32>
    tpu.vector_store %arg8[%c3_137, %c160_138], %188 {strides = array<i32>} : memref<8x224xf32, #tpu.memory_space<vmem>>, vector<1x32xf32>,
    %c3_i32_139 = arith.constant 3 : i32
    %190 = arith.addi %0, %c3_i32_139 : i32
    %191 = arith.index_cast %190 : i32 to index
    %c6_140 = arith.constant 6 : index
    %192 = memref.load %arg1[%191, %c6_140] : memref<16x7xi32, #tpu.memory_space<smem>>
    %c1542_i32_141 = arith.constant 1542 : i32
    %193 = arith.addi %192, %c1542_i32_141 : i32
    %194 = arith.index_cast %193 : i32 to index
    %c0_142 = arith.constant 0 : index
    %195 = vector.load %arg2[%194, %c0_142] : memref<1799x32xf32, #tpu.memory_space<vmem>>, vector<1x32xf32>
    %c3_143 = arith.constant 3 : index
    %c192_144 = arith.constant 192 : index
    %196 = vector.load %arg8[%c3_143, %c192_144] : memref<8x224xf32, #tpu.memory_space<vmem>>, vector<1x32xf32>
    tpu.vector_store %arg8[%c3_143, %c192_144], %195 {strides = array<i32>} : memref<8x224xf32, #tpu.memory_space<vmem>>, vector<1x32xf32>,
    %c4_i32 = arith.constant 4 : i32
    %197 = arith.addi %0, %c4_i32 : i32
    %198 = arith.index_cast %197 : i32 to index
    %c0_145 = arith.constant 0 : index
    %199 = memref.load %arg1[%198, %c0_145] : memref<16x7xi32, #tpu.memory_space<smem>>
    %c0_i32_146 = arith.constant 0 : i32
    %200 = arith.addi %199, %c0_i32_146 : i32
    %201 = arith.index_cast %200 : i32 to index
    %c0_147 = arith.constant 0 : index
    %202 = vector.load %arg2[%201, %c0_147] : memref<1799x32xf32, #tpu.memory_space<vmem>>, vector<1x32xf32>
    %c4_148 = arith.constant 4 : index
    %c0_149 = arith.constant 0 : index
    %203 = vector.load %arg8[%c4_148, %c0_149] : memref<8x224xf32, #tpu.memory_space<vmem>>, vector<1x32xf32>
    tpu.vector_store %arg8[%c4_148, %c0_149], %202 {strides = array<i32>} : memref<8x224xf32, #tpu.memory_space<vmem>>, vector<1x32xf32>,
    %c4_i32_150 = arith.constant 4 : i32
    %204 = arith.addi %0, %c4_i32_150 : i32
    %205 = arith.index_cast %204 : i32 to index
    %c1_151 = arith.constant 1 : index
    %206 = memref.load %arg1[%205, %c1_151] : memref<16x7xi32, #tpu.memory_space<smem>>
    %c257_i32_152 = arith.constant 257 : i32
    %207 = arith.addi %206, %c257_i32_152 : i32
    %208 = arith.index_cast %207 : i32 to index
    %c0_153 = arith.constant 0 : index
    %209 = vector.load %arg2[%208, %c0_153] : memref<1799x32xf32, #tpu.memory_space<vmem>>, vector<1x32xf32>
    %c4_154 = arith.constant 4 : index
    %c32_155 = arith.constant 32 : index
    %210 = vector.load %arg8[%c4_154, %c32_155] : memref<8x224xf32, #tpu.memory_space<vmem>>, vector<1x32xf32>
    tpu.vector_store %arg8[%c4_154, %c32_155], %209 {strides = array<i32>} : memref<8x224xf32, #tpu.memory_space<vmem>>, vector<1x32xf32>,
    %c4_i32_156 = arith.constant 4 : i32
    %211 = arith.addi %0, %c4_i32_156 : i32
    %212 = arith.index_cast %211 : i32 to index
    %c2_157 = arith.constant 2 : index
    %213 = memref.load %arg1[%212, %c2_157] : memref<16x7xi32, #tpu.memory_space<smem>>
    %c514_i32_158 = arith.constant 514 : i32
    %214 = arith.addi %213, %c514_i32_158 : i32
    %215 = arith.index_cast %214 : i32 to index
    %c0_159 = arith.constant 0 : index
    %216 = vector.load %arg2[%215, %c0_159] : memref<1799x32xf32, #tpu.memory_space<vmem>>, vector<1x32xf32>
    %c4_160 = arith.constant 4 : index
    %c64_161 = arith.constant 64 : index
    %217 = vector.load %arg8[%c4_160, %c64_161] : memref<8x224xf32, #tpu.memory_space<vmem>>, vector<1x32xf32>
    tpu.vector_store %arg8[%c4_160, %c64_161], %216 {strides = array<i32>} : memref<8x224xf32, #tpu.memory_space<vmem>>, vector<1x32xf32>,
    %c4_i32_162 = arith.constant 4 : i32
    %218 = arith.addi %0, %c4_i32_162 : i32
    %219 = arith.index_cast %218 : i32 to index
    %c3_163 = arith.constant 3 : index
    %220 = memref.load %arg1[%219, %c3_163] : memref<16x7xi32, #tpu.memory_space<smem>>
    %c771_i32_164 = arith.constant 771 : i32
    %221 = arith.addi %220, %c771_i32_164 : i32
    %222 = arith.index_cast %221 : i32 to index
    %c0_165 = arith.constant 0 : index
    %223 = vector.load %arg2[%222, %c0_165] : memref<1799x32xf32, #tpu.memory_space<vmem>>, vector<1x32xf32>
    %c4_166 = arith.constant 4 : index
    %c96_167 = arith.constant 96 : index
    %224 = vector.load %arg8[%c4_166, %c96_167] : memref<8x224xf32, #tpu.memory_space<vmem>>, vector<1x32xf32>
    tpu.vector_store %arg8[%c4_166, %c96_167], %223 {strides = array<i32>} : memref<8x224xf32, #tpu.memory_space<vmem>>, vector<1x32xf32>,
    %c4_i32_168 = arith.constant 4 : i32
    %225 = arith.addi %0, %c4_i32_168 : i32
    %226 = arith.index_cast %225 : i32 to index
    %c4_169 = arith.constant 4 : index
    %227 = memref.load %arg1[%226, %c4_169] : memref<16x7xi32, #tpu.memory_space<smem>>
    %c1028_i32_170 = arith.constant 1028 : i32
    %228 = arith.addi %227, %c1028_i32_170 : i32
    %229 = arith.index_cast %228 : i32 to index
    %c0_171 = arith.constant 0 : index
    %230 = vector.load %arg2[%229, %c0_171] : memref<1799x32xf32, #tpu.memory_space<vmem>>, vector<1x32xf32>
    %c4_172 = arith.constant 4 : index
    %c128_173 = arith.constant 128 : index
    %231 = vector.load %arg8[%c4_172, %c128_173] : memref<8x224xf32, #tpu.memory_space<vmem>>, vector<1x32xf32>
    tpu.vector_store %arg8[%c4_172, %c128_173], %230 {strides = array<i32>} : memref<8x224xf32, #tpu.memory_space<vmem>>, vector<1x32xf32>,
    %c4_i32_174 = arith.constant 4 : i32
    %232 = arith.addi %0, %c4_i32_174 : i32
    %233 = arith.index_cast %232 : i32 to index
    %c5_175 = arith.constant 5 : index
    %234 = memref.load %arg1[%233, %c5_175] : memref<16x7xi32, #tpu.memory_space<smem>>
    %c1285_i32_176 = arith.constant 1285 : i32
    %235 = arith.addi %234, %c1285_i32_176 : i32
    %236 = arith.index_cast %235 : i32 to index
    %c0_177 = arith.constant 0 : index
    %237 = vector.load %arg2[%236, %c0_177] : memref<1799x32xf32, #tpu.memory_space<vmem>>, vector<1x32xf32>
    %c4_178 = arith.constant 4 : index
    %c160_179 = arith.constant 160 : index
    %238 = vector.load %arg8[%c4_178, %c160_179] : memref<8x224xf32, #tpu.memory_space<vmem>>, vector<1x32xf32>
    tpu.vector_store %arg8[%c4_178, %c160_179], %237 {strides = array<i32>} : memref<8x224xf32, #tpu.memory_space<vmem>>, vector<1x32xf32>,
    %c4_i32_180 = arith.constant 4 : i32
    %239 = arith.addi %0, %c4_i32_180 : i32
    %240 = arith.index_cast %239 : i32 to index
    %c6_181 = arith.constant 6 : index
    %241 = memref.load %arg1[%240, %c6_181] : memref<16x7xi32, #tpu.memory_space<smem>>
    %c1542_i32_182 = arith.constant 1542 : i32
    %242 = arith.addi %241, %c1542_i32_182 : i32
    %243 = arith.index_cast %242 : i32 to index
    %c0_183 = arith.constant 0 : index
    %244 = vector.load %arg2[%243, %c0_183] : memref<1799x32xf32, #tpu.memory_space<vmem>>, vector<1x32xf32>
    %c4_184 = arith.constant 4 : index
    %c192_185 = arith.constant 192 : index
    %245 = vector.load %arg8[%c4_184, %c192_185] : memref<8x224xf32, #tpu.memory_space<vmem>>, vector<1x32xf32>
    tpu.vector_store %arg8[%c4_184, %c192_185], %244 {strides = array<i32>} : memref<8x224xf32, #tpu.memory_space<vmem>>, vector<1x32xf32>,
    %c5_i32 = arith.constant 5 : i32
    %246 = arith.addi %0, %c5_i32 : i32
    %247 = arith.index_cast %246 : i32 to index
    %c0_186 = arith.constant 0 : index
    %248 = memref.load %arg1[%247, %c0_186] : memref<16x7xi32, #tpu.memory_space<smem>>
    %c0_i32_187 = arith.constant 0 : i32
    %249 = arith.addi %248, %c0_i32_187 : i32
    %250 = arith.index_cast %249 : i32 to index
    %c0_188 = arith.constant 0 : index
    %251 = vector.load %arg2[%250, %c0_188] : memref<1799x32xf32, #tpu.memory_space<vmem>>, vector<1x32xf32>
    %c5_189 = arith.constant 5 : index
    %c0_190 = arith.constant 0 : index
    %252 = vector.load %arg8[%c5_189, %c0_190] : memref<8x224xf32, #tpu.memory_space<vmem>>, vector<1x32xf32>
    tpu.vector_store %arg8[%c5_189, %c0_190], %251 {strides = array<i32>} : memref<8x224xf32, #tpu.memory_space<vmem>>, vector<1x32xf32>,
    %c5_i32_191 = arith.constant 5 : i32
    %253 = arith.addi %0, %c5_i32_191 : i32
    %254 = arith.index_cast %253 : i32 to index
    %c1_192 = arith.constant 1 : index
    %255 = memref.load %arg1[%254, %c1_192] : memref<16x7xi32, #tpu.memory_space<smem>>
    %c257_i32_193 = arith.constant 257 : i32
    %256 = arith.addi %255, %c257_i32_193 : i32
    %257 = arith.index_cast %256 : i32 to index
    %c0_194 = arith.constant 0 : index
    %258 = vector.load %arg2[%257, %c0_194] : memref<1799x32xf32, #tpu.memory_space<vmem>>, vector<1x32xf32>
    %c5_195 = arith.constant 5 : index
    %c32_196 = arith.constant 32 : index
    %259 = vector.load %arg8[%c5_195, %c32_196] : memref<8x224xf32, #tpu.memory_space<vmem>>, vector<1x32xf32>
    tpu.vector_store %arg8[%c5_195, %c32_196], %258 {strides = array<i32>} : memref<8x224xf32, #tpu.memory_space<vmem>>, vector<1x32xf32>,
    %c5_i32_197 = arith.constant 5 : i32
    %260 = arith.addi %0, %c5_i32_197 : i32
    %261 = arith.index_cast %260 : i32 to index
    %c2_198 = arith.constant 2 : index
    %262 = memref.load %arg1[%261, %c2_198] : memref<16x7xi32, #tpu.memory_space<smem>>
    %c514_i32_199 = arith.constant 514 : i32
    %263 = arith.addi %262, %c514_i32_199 : i32
    %264 = arith.index_cast %263 : i32 to index
    %c0_200 = arith.constant 0 : index
    %265 = vector.load %arg2[%264, %c0_200] : memref<1799x32xf32, #tpu.memory_space<vmem>>, vector<1x32xf32>
    %c5_201 = arith.constant 5 : index
    %c64_202 = arith.constant 64 : index
    %266 = vector.load %arg8[%c5_201, %c64_202] : memref<8x224xf32, #tpu.memory_space<vmem>>, vector<1x32xf32>
    tpu.vector_store %arg8[%c5_201, %c64_202], %265 {strides = array<i32>} : memref<8x224xf32, #tpu.memory_space<vmem>>, vector<1x32xf32>,
    %c5_i32_203 = arith.constant 5 : i32
    %267 = arith.addi %0, %c5_i32_203 : i32
    %268 = arith.index_cast %267 : i32 to index
    %c3_204 = arith.constant 3 : index
    %269 = memref.load %arg1[%268, %c3_204] : memref<16x7xi32, #tpu.memory_space<smem>>
    %c771_i32_205 = arith.constant 771 : i32
    %270 = arith.addi %269, %c771_i32_205 : i32
    %271 = arith.index_cast %270 : i32 to index
    %c0_206 = arith.constant 0 : index
    %272 = vector.load %arg2[%271, %c0_206] : memref<1799x32xf32, #tpu.memory_space<vmem>>, vector<1x32xf32>
    %c5_207 = arith.constant 5 : index
    %c96_208 = arith.constant 96 : index
    %273 = vector.load %arg8[%c5_207, %c96_208] : memref<8x224xf32, #tpu.memory_space<vmem>>, vector<1x32xf32>
    tpu.vector_store %arg8[%c5_207, %c96_208], %272 {strides = array<i32>} : memref<8x224xf32, #tpu.memory_space<vmem>>, vector<1x32xf32>,
    %c5_i32_209 = arith.constant 5 : i32
    %274 = arith.addi %0, %c5_i32_209 : i32
    %275 = arith.index_cast %274 : i32 to index
    %c4_210 = arith.constant 4 : index
    %276 = memref.load %arg1[%275, %c4_210] : memref<16x7xi32, #tpu.memory_space<smem>>
    %c1028_i32_211 = arith.constant 1028 : i32
    %277 = arith.addi %276, %c1028_i32_211 : i32
    %278 = arith.index_cast %277 : i32 to index
    %c0_212 = arith.constant 0 : index
    %279 = vector.load %arg2[%278, %c0_212] : memref<1799x32xf32, #tpu.memory_space<vmem>>, vector<1x32xf32>
    %c5_213 = arith.constant 5 : index
    %c128_214 = arith.constant 128 : index
    %280 = vector.load %arg8[%c5_213, %c128_214] : memref<8x224xf32, #tpu.memory_space<vmem>>, vector<1x32xf32>
    tpu.vector_store %arg8[%c5_213, %c128_214], %279 {strides = array<i32>} : memref<8x224xf32, #tpu.memory_space<vmem>>, vector<1x32xf32>,
    %c5_i32_215 = arith.constant 5 : i32
    %281 = arith.addi %0, %c5_i32_215 : i32
    %282 = arith.index_cast %281 : i32 to index
    %c5_216 = arith.constant 5 : index
    %283 = memref.load %arg1[%282, %c5_216] : memref<16x7xi32, #tpu.memory_space<smem>>
    %c1285_i32_217 = arith.constant 1285 : i32
    %284 = arith.addi %283, %c1285_i32_217 : i32
    %285 = arith.index_cast %284 : i32 to index
    %c0_218 = arith.constant 0 : index
    %286 = vector.load %arg2[%285, %c0_218] : memref<1799x32xf32, #tpu.memory_space<vmem>>, vector<1x32xf32>
    %c5_219 = arith.constant 5 : index
    %c160_220 = arith.constant 160 : index
    %287 = vector.load %arg8[%c5_219, %c160_220] : memref<8x224xf32, #tpu.memory_space<vmem>>, vector<1x32xf32>
    tpu.vector_store %arg8[%c5_219, %c160_220], %286 {strides = array<i32>} : memref<8x224xf32, #tpu.memory_space<vmem>>, vector<1x32xf32>,
    %c5_i32_221 = arith.constant 5 : i32
    %288 = arith.addi %0, %c5_i32_221 : i32
    %289 = arith.index_cast %288 : i32 to index
    %c6_222 = arith.constant 6 : index
    %290 = memref.load %arg1[%289, %c6_222] : memref<16x7xi32, #tpu.memory_space<smem>>
    %c1542_i32_223 = arith.constant 1542 : i32
    %291 = arith.addi %290, %c1542_i32_223 : i32
    %292 = arith.index_cast %291 : i32 to index
    %c0_224 = arith.constant 0 : index
    %293 = vector.load %arg2[%292, %c0_224] : memref<1799x32xf32, #tpu.memory_space<vmem>>, vector<1x32xf32>
    %c5_225 = arith.constant 5 : index
    %c192_226 = arith.constant 192 : index
    %294 = vector.load %arg8[%c5_225, %c192_226] : memref<8x224xf32, #tpu.memory_space<vmem>>, vector<1x32xf32>
    tpu.vector_store %arg8[%c5_225, %c192_226], %293 {strides = array<i32>} : memref<8x224xf32, #tpu.memory_space<vmem>>, vector<1x32xf32>,
    %c6_i32 = arith.constant 6 : i32
    %295 = arith.addi %0, %c6_i32 : i32
    %296 = arith.index_cast %295 : i32 to index
    %c0_227 = arith.constant 0 : index
    %297 = memref.load %arg1[%296, %c0_227] : memref<16x7xi32, #tpu.memory_space<smem>>
    %c0_i32_228 = arith.constant 0 : i32
    %298 = arith.addi %297, %c0_i32_228 : i32
    %299 = arith.index_cast %298 : i32 to index
    %c0_229 = arith.constant 0 : index
    %300 = vector.load %arg2[%299, %c0_229] : memref<1799x32xf32, #tpu.memory_space<vmem>>, vector<1x32xf32>
    %c6_230 = arith.constant 6 : index
    %c0_231 = arith.constant 0 : index
    %301 = vector.load %arg8[%c6_230, %c0_231] : memref<8x224xf32, #tpu.memory_space<vmem>>, vector<1x32xf32>
    tpu.vector_store %arg8[%c6_230, %c0_231], %300 {strides = array<i32>} : memref<8x224xf32, #tpu.memory_space<vmem>>, vector<1x32xf32>,
    %c6_i32_232 = arith.constant 6 : i32
    %302 = arith.addi %0, %c6_i32_232 : i32
    %303 = arith.index_cast %302 : i32 to index
    %c1_233 = arith.constant 1 : index
    %304 = memref.load %arg1[%303, %c1_233] : memref<16x7xi32, #tpu.memory_space<smem>>
    %c257_i32_234 = arith.constant 257 : i32
    %305 = arith.addi %304, %c257_i32_234 : i32
    %306 = arith.index_cast %305 : i32 to index
    %c0_235 = arith.constant 0 : index
    %307 = vector.load %arg2[%306, %c0_235] : memref<1799x32xf32, #tpu.memory_space<vmem>>, vector<1x32xf32>
    %c6_236 = arith.constant 6 : index
    %c32_237 = arith.constant 32 : index
    %308 = vector.load %arg8[%c6_236, %c32_237] : memref<8x224xf32, #tpu.memory_space<vmem>>, vector<1x32xf32>
    tpu.vector_store %arg8[%c6_236, %c32_237], %307 {strides = array<i32>} : memref<8x224xf32, #tpu.memory_space<vmem>>, vector<1x32xf32>,
    %c6_i32_238 = arith.constant 6 : i32
    %309 = arith.addi %0, %c6_i32_238 : i32
    %310 = arith.index_cast %309 : i32 to index
    %c2_239 = arith.constant 2 : index
    %311 = memref.load %arg1[%310, %c2_239] : memref<16x7xi32, #tpu.memory_space<smem>>
    %c514_i32_240 = arith.constant 514 : i32
    %312 = arith.addi %311, %c514_i32_240 : i32
    %313 = arith.index_cast %312 : i32 to index
    %c0_241 = arith.constant 0 : index
    %314 = vector.load %arg2[%313, %c0_241] : memref<1799x32xf32, #tpu.memory_space<vmem>>, vector<1x32xf32>
    %c6_242 = arith.constant 6 : index
    %c64_243 = arith.constant 64 : index
    %315 = vector.load %arg8[%c6_242, %c64_243] : memref<8x224xf32, #tpu.memory_space<vmem>>, vector<1x32xf32>
    tpu.vector_store %arg8[%c6_242, %c64_243], %314 {strides = array<i32>} : memref<8x224xf32, #tpu.memory_space<vmem>>, vector<1x32xf32>,
    %c6_i32_244 = arith.constant 6 : i32
    %316 = arith.addi %0, %c6_i32_244 : i32
    %317 = arith.index_cast %316 : i32 to index
    %c3_245 = arith.constant 3 : index
    %318 = memref.load %arg1[%317, %c3_245] : memref<16x7xi32, #tpu.memory_space<smem>>
    %c771_i32_246 = arith.constant 771 : i32
    %319 = arith.addi %318, %c771_i32_246 : i32
    %320 = arith.index_cast %319 : i32 to index
    %c0_247 = arith.constant 0 : index
    %321 = vector.load %arg2[%320, %c0_247] : memref<1799x32xf32, #tpu.memory_space<vmem>>, vector<1x32xf32>
    %c6_248 = arith.constant 6 : index
    %c96_249 = arith.constant 96 : index
    %322 = vector.load %arg8[%c6_248, %c96_249] : memref<8x224xf32, #tpu.memory_space<vmem>>, vector<1x32xf32>
    tpu.vector_store %arg8[%c6_248, %c96_249], %321 {strides = array<i32>} : memref<8x224xf32, #tpu.memory_space<vmem>>, vector<1x32xf32>,
    %c6_i32_250 = arith.constant 6 : i32
    %323 = arith.addi %0, %c6_i32_250 : i32
    %324 = arith.index_cast %323 : i32 to index
    %c4_251 = arith.constant 4 : index
    %325 = memref.load %arg1[%324, %c4_251] : memref<16x7xi32, #tpu.memory_space<smem>>
    %c1028_i32_252 = arith.constant 1028 : i32
    %326 = arith.addi %325, %c1028_i32_252 : i32
    %327 = arith.index_cast %326 : i32 to index
    %c0_253 = arith.constant 0 : index
    %328 = vector.load %arg2[%327, %c0_253] : memref<1799x32xf32, #tpu.memory_space<vmem>>, vector<1x32xf32>
    %c6_254 = arith.constant 6 : index
    %c128_255 = arith.constant 128 : index
    %329 = vector.load %arg8[%c6_254, %c128_255] : memref<8x224xf32, #tpu.memory_space<vmem>>, vector<1x32xf32>
    tpu.vector_store %arg8[%c6_254, %c128_255], %328 {strides = array<i32>} : memref<8x224xf32, #tpu.memory_space<vmem>>, vector<1x32xf32>,
    %c6_i32_256 = arith.constant 6 : i32
    %330 = arith.addi %0, %c6_i32_256 : i32
    %331 = arith.index_cast %330 : i32 to index
    %c5_257 = arith.constant 5 : index
    %332 = memref.load %arg1[%331, %c5_257] : memref<16x7xi32, #tpu.memory_space<smem>>
    %c1285_i32_258 = arith.constant 1285 : i32
    %333 = arith.addi %332, %c1285_i32_258 : i32
    %334 = arith.index_cast %333 : i32 to index
    %c0_259 = arith.constant 0 : index
    %335 = vector.load %arg2[%334, %c0_259] : memref<1799x32xf32, #tpu.memory_space<vmem>>, vector<1x32xf32>
    %c6_260 = arith.constant 6 : index
    %c160_261 = arith.constant 160 : index
    %336 = vector.load %arg8[%c6_260, %c160_261] : memref<8x224xf32, #tpu.memory_space<vmem>>, vector<1x32xf32>
    tpu.vector_store %arg8[%c6_260, %c160_261], %335 {strides = array<i32>} : memref<8x224xf32, #tpu.memory_space<vmem>>, vector<1x32xf32>,
    %c6_i32_262 = arith.constant 6 : i32
    %337 = arith.addi %0, %c6_i32_262 : i32
    %338 = arith.index_cast %337 : i32 to index
    %c6_263 = arith.constant 6 : index
    %339 = memref.load %arg1[%338, %c6_263] : memref<16x7xi32, #tpu.memory_space<smem>>
    %c1542_i32_264 = arith.constant 1542 : i32
    %340 = arith.addi %339, %c1542_i32_264 : i32
    %341 = arith.index_cast %340 : i32 to index
    %c0_265 = arith.constant 0 : index
    %342 = vector.load %arg2[%341, %c0_265] : memref<1799x32xf32, #tpu.memory_space<vmem>>, vector<1x32xf32>
    %c6_266 = arith.constant 6 : index
    %c192_267 = arith.constant 192 : index
    %343 = vector.load %arg8[%c6_266, %c192_267] : memref<8x224xf32, #tpu.memory_space<vmem>>, vector<1x32xf32>
    tpu.vector_store %arg8[%c6_266, %c192_267], %342 {strides = array<i32>} : memref<8x224xf32, #tpu.memory_space<vmem>>, vector<1x32xf32>,
    %c7_i32 = arith.constant 7 : i32
    %344 = arith.addi %0, %c7_i32 : i32
    %345 = arith.index_cast %344 : i32 to index
    %c0_268 = arith.constant 0 : index
    %346 = memref.load %arg1[%345, %c0_268] : memref<16x7xi32, #tpu.memory_space<smem>>
    %c0_i32_269 = arith.constant 0 : i32
    %347 = arith.addi %346, %c0_i32_269 : i32
    %348 = arith.index_cast %347 : i32 to index
    %c0_270 = arith.constant 0 : index
    %349 = vector.load %arg2[%348, %c0_270] : memref<1799x32xf32, #tpu.memory_space<vmem>>, vector<1x32xf32>
    %c7 = arith.constant 7 : index
    %c0_271 = arith.constant 0 : index
    %350 = vector.load %arg8[%c7, %c0_271] : memref<8x224xf32, #tpu.memory_space<vmem>>, vector<1x32xf32>
    tpu.vector_store %arg8[%c7, %c0_271], %349 {strides = array<i32>} : memref<8x224xf32, #tpu.memory_space<vmem>>, vector<1x32xf32>,
    %c7_i32_272 = arith.constant 7 : i32
    %351 = arith.addi %0, %c7_i32_272 : i32
    %352 = arith.index_cast %351 : i32 to index
    %c1_273 = arith.constant 1 : index
    %353 = memref.load %arg1[%352, %c1_273] : memref<16x7xi32, #tpu.memory_space<smem>>
    %c257_i32_274 = arith.constant 257 : i32
    %354 = arith.addi %353, %c257_i32_274 : i32
    %355 = arith.index_cast %354 : i32 to index
    %c0_275 = arith.constant 0 : index
    %356 = vector.load %arg2[%355, %c0_275] : memref<1799x32xf32, #tpu.memory_space<vmem>>, vector<1x32xf32>
    %c7_276 = arith.constant 7 : index
    %c32_277 = arith.constant 32 : index
    %357 = vector.load %arg8[%c7_276, %c32_277] : memref<8x224xf32, #tpu.memory_space<vmem>>, vector<1x32xf32>
    tpu.vector_store %arg8[%c7_276, %c32_277], %356 {strides = array<i32>} : memref<8x224xf32, #tpu.memory_space<vmem>>, vector<1x32xf32>,
    %c7_i32_278 = arith.constant 7 : i32
    %358 = arith.addi %0, %c7_i32_278 : i32
    %359 = arith.index_cast %358 : i32 to index
    %c2_279 = arith.constant 2 : index
    %360 = memref.load %arg1[%359, %c2_279] : memref<16x7xi32, #tpu.memory_space<smem>>
    %c514_i32_280 = arith.constant 514 : i32
    %361 = arith.addi %360, %c514_i32_280 : i32
    %362 = arith.index_cast %361 : i32 to index
    %c0_281 = arith.constant 0 : index
    %363 = vector.load %arg2[%362, %c0_281] : memref<1799x32xf32, #tpu.memory_space<vmem>>, vector<1x32xf32>
    %c7_282 = arith.constant 7 : index
    %c64_283 = arith.constant 64 : index
    %364 = vector.load %arg8[%c7_282, %c64_283] : memref<8x224xf32, #tpu.memory_space<vmem>>, vector<1x32xf32>
    tpu.vector_store %arg8[%c7_282, %c64_283], %363 {strides = array<i32>} : memref<8x224xf32, #tpu.memory_space<vmem>>, vector<1x32xf32>,
    %c7_i32_284 = arith.constant 7 : i32
    %365 = arith.addi %0, %c7_i32_284 : i32
    %366 = arith.index_cast %365 : i32 to index
    %c3_285 = arith.constant 3 : index
    %367 = memref.load %arg1[%366, %c3_285] : memref<16x7xi32, #tpu.memory_space<smem>>
    %c771_i32_286 = arith.constant 771 : i32
    %368 = arith.addi %367, %c771_i32_286 : i32
    %369 = arith.index_cast %368 : i32 to index
    %c0_287 = arith.constant 0 : index
    %370 = vector.load %arg2[%369, %c0_287] : memref<1799x32xf32, #tpu.memory_space<vmem>>, vector<1x32xf32>
    %c7_288 = arith.constant 7 : index
    %c96_289 = arith.constant 96 : index
    %371 = vector.load %arg8[%c7_288, %c96_289] : memref<8x224xf32, #tpu.memory_space<vmem>>, vector<1x32xf32>
    tpu.vector_store %arg8[%c7_288, %c96_289], %370 {strides = array<i32>} : memref<8x224xf32, #tpu.memory_space<vmem>>, vector<1x32xf32>,
    %c7_i32_290 = arith.constant 7 : i32
    %372 = arith.addi %0, %c7_i32_290 : i32
    %373 = arith.index_cast %372 : i32 to index
    %c4_291 = arith.constant 4 : index
    %374 = memref.load %arg1[%373, %c4_291] : memref<16x7xi32, #tpu.memory_space<smem>>
    %c1028_i32_292 = arith.constant 1028 : i32
    %375 = arith.addi %374, %c1028_i32_292 : i32
    %376 = arith.index_cast %375 : i32 to index
    %c0_293 = arith.constant 0 : index
    %377 = vector.load %arg2[%376, %c0_293] : memref<1799x32xf32, #tpu.memory_space<vmem>>, vector<1x32xf32>
    %c7_294 = arith.constant 7 : index
    %c128_295 = arith.constant 128 : index
    %378 = vector.load %arg8[%c7_294, %c128_295] : memref<8x224xf32, #tpu.memory_space<vmem>>, vector<1x32xf32>
    tpu.vector_store %arg8[%c7_294, %c128_295], %377 {strides = array<i32>} : memref<8x224xf32, #tpu.memory_space<vmem>>, vector<1x32xf32>,
    %c7_i32_296 = arith.constant 7 : i32
    %379 = arith.addi %0, %c7_i32_296 : i32
    %380 = arith.index_cast %379 : i32 to index
    %c5_297 = arith.constant 5 : index
    %381 = memref.load %arg1[%380, %c5_297] : memref<16x7xi32, #tpu.memory_space<smem>>
    %c1285_i32_298 = arith.constant 1285 : i32
    %382 = arith.addi %381, %c1285_i32_298 : i32
    %383 = arith.index_cast %382 : i32 to index
    %c0_299 = arith.constant 0 : index
    %384 = vector.load %arg2[%383, %c0_299] : memref<1799x32xf32, #tpu.memory_space<vmem>>, vector<1x32xf32>
    %c7_300 = arith.constant 7 : index
    %c160_301 = arith.constant 160 : index
    %385 = vector.load %arg8[%c7_300, %c160_301] : memref<8x224xf32, #tpu.memory_space<vmem>>, vector<1x32xf32>
    tpu.vector_store %arg8[%c7_300, %c160_301], %384 {strides = array<i32>} : memref<8x224xf32, #tpu.memory_space<vmem>>, vector<1x32xf32>,
    %c7_i32_302 = arith.constant 7 : i32
    %386 = arith.addi %0, %c7_i32_302 : i32
    %387 = arith.index_cast %386 : i32 to index
    %c6_303 = arith.constant 6 : index
    %388 = memref.load %arg1[%387, %c6_303] : memref<16x7xi32, #tpu.memory_space<smem>>
    %c1542_i32_304 = arith.constant 1542 : i32
    %389 = arith.addi %388, %c1542_i32_304 : i32
    %390 = arith.index_cast %389 : i32 to index
    %c0_305 = arith.constant 0 : index
    %391 = vector.load %arg2[%390, %c0_305] : memref<1799x32xf32, #tpu.memory_space<vmem>>, vector<1x32xf32>
    %c7_306 = arith.constant 7 : index
    %c192_307 = arith.constant 192 : index
    %392 = vector.load %arg8[%c7_306, %c192_307] : memref<8x224xf32, #tpu.memory_space<vmem>>, vector<1x32xf32>
    tpu.vector_store %arg8[%c7_306, %c192_307], %391 {strides = array<i32>} : memref<8x224xf32, #tpu.memory_space<vmem>>, vector<1x32xf32>,
    %c0_308 = arith.constant 0 : index
    %c0_309 = arith.constant 0 : index
    %393 = vector.load %arg8[%c0_308, %c0_309] : memref<8x224xf32, #tpu.memory_space<vmem>>, vector<8x224xf32>
    %394 = arith.truncf %393 : vector<8x224xf32> to vector<8x224xbf16>
    %c0_310 = arith.constant 0 : index
    %c0_311 = arith.constant 0 : index
    %395 = vector.load %arg3[%c0_310, %c0_311] : memref<224x128xbf16, #tpu.memory_space<vmem>>, vector<224x128xbf16>
    %cst = arith.constant dense<0.000000e+00> : vector<8x128xf32>
    %396 = tpu.matmul %394, %395, %cst {dimension_numbers = #tpu.dot_dimension_numbers<[1], [0], [0], [1], [0, 0, 1, 1], [], []>} : vector<8x224xbf16>, vector<224x128xbf16>, vector<8x128xf32> -> vector<8x128xf32>
    %c0_312 = arith.constant 0 : index
    %c0_313 = arith.constant 0 : index
    %397 = vector.load %arg4[%c0_312, %c0_313] : memref<1x128xf32, #tpu.memory_space<vmem>>, vector<1x128xf32>
    %398 = vector.broadcast %397 : vector<1x128xf32> to vector<8x128xf32>
    %399 = arith.addf %396, %398 : vector<8x128xf32>
    %400 = arith.negf %399 : vector<8x128xf32>
    %401 = math.exp %400 : vector<8x128xf32>
    %cst_314 = arith.constant 1.000000e+00 : f32
    %402 = vector.broadcast %cst_314 : f32 to vector<8x128xf32>
    %403 = arith.addf %402, %401 : vector<8x128xf32>
    %404 = arith.divf %402, %403 : vector<8x128xf32>
    %405 = arith.mulf %399, %404 : vector<8x128xf32>
    %406 = arith.truncf %405 : vector<8x128xf32> to vector<8x128xbf16>
    %c0_315 = arith.constant 0 : index
    %c0_316 = arith.constant 0 : index
    %407 = vector.load %arg5[%c0_315, %c0_316] : memref<128x32xbf16, #tpu.memory_space<vmem>>, vector<128x32xbf16>
    %cst_317 = arith.constant dense<0.000000e+00> : vector<8x32xf32>
    %408 = tpu.matmul %406, %407, %cst_317 {dimension_numbers = #tpu.dot_dimension_numbers<[1], [0], [0], [1], [0, 0, 1, 1], [], []>} : vector<8x128xbf16>, vector<128x32xbf16>, vector<8x32xf32> -> vector<8x32xf32>
    %c0_318 = arith.constant 0 : index
    %c0_319 = arith.constant 0 : index
    %409 = vector.load %arg6[%c0_318, %c0_319] : memref<1x32xf32, #tpu.memory_space<vmem>>, vector<1x32xf32>
    %410 = vector.broadcast %409 : vector<1x32xf32> to vector<8x32xf32>
    %411 = arith.addf %408, %410 : vector<8x32xf32>
    %c0_320 = arith.constant 0 : index
    %c0_321 = arith.constant 0 : index
    %412 = vector.load %arg7[%c0_320, %c0_321] : memref<8x32xf32, #tpu.memory_space<vmem>>, vector<8x32xf32>
    tpu.vector_store %arg7[%c0_320, %c0_321], %411 {strides = array<i32>} : memref<8x32xf32, #tpu.memory_space<vmem>>, vector<8x32xf32>,
    return
  }
  func.func @transform_0(%arg0: i32, %arg1: memref<16x7xi32, #tpu.memory_space<smem>>) -> (i32, i32) {
    %c0_i32 = arith.constant 0 : i32
    %c0_i32_0 = arith.constant 0 : i32
    %c0_i32_1 = arith.constant 0 : i32
    return %c0_i32, %c0_i32_0 : i32, i32
  }
  func.func @transform_1(%arg0: i32, %arg1: memref<16x7xi32, #tpu.memory_space<smem>>) -> (i32, i32) {
    %c0_i32 = arith.constant 0 : i32
    %c0_i32_0 = arith.constant 0 : i32
    %c0_i32_1 = arith.constant 0 : i32
    return %c0_i32, %c0_i32_0 : i32, i32
  }
  func.func @transform_2(%arg0: i32, %arg1: memref<16x7xi32, #tpu.memory_space<smem>>) -> (i32, i32) {
    %c0_i32 = arith.constant 0 : i32
    %c0_i32_0 = arith.constant 0 : i32
    %c0_i32_1 = arith.constant 0 : i32
    return %c0_i32, %c0_i32_0 : i32, i32
  }
  func.func @transform_3(%arg0: i32, %arg1: memref<16x7xi32, #tpu.memory_space<smem>>) -> (i32, i32) {
    %c0_i32 = arith.constant 0 : i32
    %c0_i32_0 = arith.constant 0 : i32
    %c0_i32_1 = arith.constant 0 : i32
    return %c0_i32, %c0_i32_0 : i32, i32
  }
  func.func @transform_4(%arg0: i32, %arg1: memref<16x7xi32, #tpu.memory_space<smem>>) -> (i32, i32) {
    %c0_i32 = arith.constant 0 : i32
    %c0_i32_0 = arith.constant 0 : i32
    %c0_i32_1 = arith.constant 0 : i32
    return %c0_i32, %c0_i32_0 : i32, i32
  }
  func.func @transform_5(%arg0: i32, %arg1: memref<16x7xi32, #tpu.memory_space<smem>>) -> (i32, i32) {
    %c0_i32 = arith.constant 0 : i32
    %c0_i32_0 = arith.constant 0 : i32
    return %arg0, %c0_i32 : i32, i32
  }
}

</mosaic_0001>

<llo_original>
// kernel: tpu_custom_call.1
$region0: #{tpu_custom_call.1}
  #allocation0 [shape = 'u32[]', space=smem, size = 0x4, offset = 0x4, fixed_abs, tag = 'smem constant byte address 0x4 - core index']
  #allocation1 [shape = 'u32[144,128]{1,0:T(1,128)}', space=vmem, size = 0x12000, scoped, tag = 'internal scratch']
  #allocation2 [shape = 'f32[8,224]{1,0:T(8,128)}', space=vmem, size = 0x2000, scoped, tag = 'scratch operand']
  #allocation3 [shape = 's32[1]{0}', space=sflag, size = 0x4, scoped, tag = 'scoped memory for tpu_custom_call.1']
  #allocation4 [shape = 'u8[8192]{0}', space=smem, size = 0x2000, scoped, tag = 'prefetched SMEM operand 0']
  %s0 = inlined_call_operand.vmem [shape: s32[16,7], index: 0, kind: input, shape index: {}]
  %s1 = inlined_call_operand.vmem [shape: f32[1799,32], index: 1, kind: input, shape index: {}]
  %s2 = inlined_call_operand.vmem [shape: bf16[224,128], index: 2, kind: input, shape index: {}]
  %s3 = inlined_call_operand.vmem [shape: f32[1,128], index: 3, kind: input, shape index: {}]
  %s4 = inlined_call_operand.vmem [shape: bf16[128,32], index: 4, kind: input, shape index: {}]
  %s5 = inlined_call_operand.vmem [shape: f32[1,32], index: 5, kind: input, shape index: {}]
  %s6 = inlined_call_operand.hbm [shape: f32[16,32], index: 6, kind: output, shape index: {}]
  %s7 = sld [smem:[#allocation0]]
  $region53: #{tpu_custom_call.1} parent=0
    _
  %s9 = ssub.s32 1, %s7
  %s10 = scalar_select 0, %s9, %s7
  %s11 = sshll.u32 %s0, 4
  %s12 = int_to_ptr.vmem [resolvable:$true] %s11
  %14 = dma.vmem_to_smem %s12, 256, [#allocation4], [#allocation3]
  %15 = dma.done [#allocation3], 256
  %16 = sfence
  $region1: #{tpu_custom_call.1} parent=0
    #allocation5 [shape = 'u8[8192]{0}', space=vmem, size = 0x2000, scoped, tag = 'output window, operand 0']
    #allocation6 [shape = 's32[2]{0}', space=sflag, size = 0x8, scoped, tag = 'scoped memory for tpu_custom_call.1']
    %17 = vsyncpa [#allocation6], 0
    %s18 = scalar_lea.sflag [#allocation6], 1
    %19 = vsyncpa %s18, 0
    loop: start=0, step=1, limit=4
    $region2: #{tpu_custom_call.1} parent=1 // loop_pre_header
      _
    $region3: #{tpu_custom_call.1} parent=1 // loop_header
      %s21 = sphi 0, %s25
      %p22 = scmp.ge.s32.totalorder %s21, 4
      %s29 = sphi 0, %s29
      %s31 = sphi 0, %s29
      %s32 = sphi 0, %s31
      %s46 = sphi 0, %s32
      %s50 = sphi 0, %s50
      %s52 = sphi 0, %s50
      %s53 = sphi 0, %s52
      %s67 = sphi 0, %s53
      %s71 = sphi 0, %s71
      %s73 = sphi 0, %s71
      %s74 = sphi 0, %s73
      %s88 = sphi 0, %s74
      %s92 = sphi 0, %s92
      %s94 = sphi 0, %s92
      %s95 = sphi 0, %s94
      %s109 = sphi 0, %s95
      %s113 = sphi 0, %s113
      %s115 = sphi 0, %s113
      %s116 = sphi 0, %s115
      %s130 = sphi 0, %s116
      %s136 = sphi 0, %s138
      %s139 = sphi 0, %s136
      %s140 = sphi 0, %s139
      %s156 = sphi 0, %s140
    $region4: #{tpu_custom_call.1} parent=1 // loop_header_branch
      %24 = sbr.rel (%p22) target = $region8
    $region5: #{tpu_custom_call.1} parent=1 // loop_body
      %s26 = ssub.s32 %s21, 1
      %s27 = ssub.s32 %s21, 2
      %s28 = sadd.s32 %s21, 1
      %s30 = sadd.s32 %s29, 1
      %p33 = scmp.eq.s32.totalorder %s21, 1
      %p34 = scmp.ne.s32.totalorder %s29, %s31
      %p35 = scmp.eq.s32.totalorder %s21, 0
      %p36 = por %p34, %p35
      %p37 = scmp.ne.s32.totalorder %s29, %s31
      %p38 = scmp.eq.s32.totalorder %s26, 1
      %p39 = por %p37, %p38
      %p40 = scmp.ne.s32.totalorder %s31, %s32
      %p41 = scmp.eq.s32.totalorder %s26, 0
      %p42 = por %p40, %p41
      %p43 = scmp.ne.s32.totalorder %s31, %s32
      %p44 = scmp.eq.s32.totalorder %s27, 1
      %p45 = por %p43, %p44
      %p47 = scmp.ne.s32.totalorder %s32, %s46
      %p48 = scmp.eq.s32.totalorder %s27, 0
      %p49 = por %p47, %p48
      %s51 = sadd.s32 %s50, 1
      %p54 = scmp.eq.s32.totalorder %s21, 1
      %p55 = scmp.ne.s32.totalorder %s50, %s52
      %p56 = scmp.eq.s32.totalorder %s21, 0
      %p57 = por %p55, %p56
      %p58 = scmp.ne.s32.totalorder %s50, %s52
      %p59 = scmp.eq.s32.totalorder %s26, 1
      %p60 = por %p58, %p59
      %p61 = scmp.ne.s32.totalorder %s52, %s53
      %p62 = scmp.eq.s32.totalorder %s26, 0
      %p63 = por %p61, %p62
      %p64 = scmp.ne.s32.totalorder %s52, %s53
      %p65 = scmp.eq.s32.totalorder %s27, 1
      %p66 = por %p64, %p65
      %p68 = scmp.ne.s32.totalorder %s53, %s67
      %p69 = scmp.eq.s32.totalorder %s27, 0
      %p70 = por %p68, %p69
      %s72 = sadd.s32 %s71, 1
      %p75 = scmp.eq.s32.totalorder %s21, 1
      %p76 = scmp.ne.s32.totalorder %s71, %s73
      %p77 = scmp.eq.s32.totalorder %s21, 0
      %p78 = por %p76, %p77
      %p79 = scmp.ne.s32.totalorder %s71, %s73
      %p80 = scmp.eq.s32.totalorder %s26, 1
      %p81 = por %p79, %p80
      %p82 = scmp.ne.s32.totalorder %s73, %s74
      %p83 = scmp.eq.s32.totalorder %s26, 0
      %p84 = por %p82, %p83
      %p85 = scmp.ne.s32.totalorder %s73, %s74
      %p86 = scmp.eq.s32.totalorder %s27, 1
      %p87 = por %p85, %p86
      %p89 = scmp.ne.s32.totalorder %s74, %s88
      %p90 = scmp.eq.s32.totalorder %s27, 0
      %p91 = por %p89, %p90
      %s93 = sadd.s32 %s92, 1
      %p96 = scmp.eq.s32.totalorder %s21, 1
      %p97 = scmp.ne.s32.totalorder %s92, %s94
      %p98 = scmp.eq.s32.totalorder %s21, 0
      %p99 = por %p97, %p98
      %p100 = scmp.ne.s32.totalorder %s92, %s94
      %p101 = scmp.eq.s32.totalorder %s26, 1
      %p102 = por %p100, %p101
      %p103 = scmp.ne.s32.totalorder %s94, %s95
      %p104 = scmp.eq.s32.totalorder %s26, 0
      %p105 = por %p103, %p104
      %p106 = scmp.ne.s32.totalorder %s94, %s95
      %p107 = scmp.eq.s32.totalorder %s27, 1
      %p108 = por %p106, %p107
      %p110 = scmp.ne.s32.totalorder %s95, %s109
      %p111 = scmp.eq.s32.totalorder %s27, 0
      %p112 = por %p110, %p111
      %s114 = sadd.s32 %s113, 1
      %p117 = scmp.eq.s32.totalorder %s21, 1
      %p118 = scmp.ne.s32.totalorder %s113, %s115
      %p119 = scmp.eq.s32.totalorder %s21, 0
      %p120 = por %p118, %p119
      %p121 = scmp.ne.s32.totalorder %s113, %s115
      %p122 = scmp.eq.s32.totalorder %s26, 1
      %p123 = por %p121, %p122
      %p124 = scmp.ne.s32.totalorder %s115, %s116
      %p125 = scmp.eq.s32.totalorder %s26, 0
      %p126 = por %p124, %p125
      %p127 = scmp.ne.s32.totalorder %s115, %s116
      %p128 = scmp.eq.s32.totalorder %s27, 1
      %p129 = por %p127, %p128
      %p131 = scmp.ne.s32.totalorder %s116, %s130
      %p132 = scmp.eq.s32.totalorder %s27, 0
      %p133 = por %p131, %p132
      %s134 = ssub.s32 %s21, %s28
      %p135 = scmp.eq.s32.totalorder %s134, 0
      %s137 = sadd.s32 %s136, 1
      %s138 = scalar_select %p135, %s136, %s137
      %p141 = pneg %p135
      %p142 = scmp.eq.s32.totalorder %s21, 1
      %p143 = por %p141, %p142
      %p144 = scmp.ne.s32.totalorder %s136, %s139
      %p145 = scmp.eq.s32.totalorder %s21, 0
      %p146 = por %p144, %p145
      %p147 = scmp.ne.s32.totalorder %s136, %s139
      %p148 = scmp.eq.s32.totalorder %s26, 1
      %p149 = por %p147, %p148
      %p150 = scmp.ne.s32.totalorder %s139, %s140
      %p151 = scmp.eq.s32.totalorder %s26, 0
      %p152 = por %p150, %p151
      %p153 = scmp.ne.s32.totalorder %s139, %s140
      %p154 = scmp.eq.s32.totalorder %s27, 1
      %p155 = por %p153, %p154
      %p157 = scmp.ne.s32.totalorder %s140, %s156
      %p158 = scmp.eq.s32.totalorder %s27, 0
      %p159 = por %p157, %p158
      %p160 = scmp.le.s32.totalorder 1, %s21
      %p161 = scmp.lt.s32.totalorder %s21, 3
      %p162 = pnand %p160, %p161
      %p163 = pneg %p162
      // Predicated region
      $region9: #{tpu_custom_call.1} parent=5 // pred_check
        _
      $region10: #{tpu_custom_call.1} parent=5 // pred_check_branch
        %165 = sbr.rel (%p162) target = $region12
      $region11: #{tpu_custom_call.1} parent=5 // pred_region
        %s166 = ssub.s32 %s21, 1
        // Predicated region
        $region13: #{tpu_custom_call.1} parent=11 // pred_check
          %p167 = pneg %p42
        $region14: #{tpu_custom_call.1} parent=11 // pred_check_branch
          %169 = sbr.rel (%p167) target = $region16
        $region15: #{tpu_custom_call.1} parent=11 // pred_region
          _
        $region16: #{tpu_custom_call.1} parent=11 // pred_fallthru
          _
        // Predicated region
        $region17: #{tpu_custom_call.1} parent=11 // pred_check
          %p170 = pneg %p63
        $region18: #{tpu_custom_call.1} parent=11 // pred_check_branch
          %172 = sbr.rel (%p170) target = $region20
        $region19: #{tpu_custom_call.1} parent=11 // pred_region
          _
        $region20: #{tpu_custom_call.1} parent=11 // pred_fallthru
          _
        // Predicated region
        $region21: #{tpu_custom_call.1} parent=11 // pred_check
          %p173 = pneg %p84
        $region22: #{tpu_custom_call.1} parent=11 // pred_check_branch
          %175 = sbr.rel (%p173) target = $region24
        $region23: #{tpu_custom_call.1} parent=11 // pred_region
          _
        $region24: #{tpu_custom_call.1} parent=11 // pred_fallthru
          _
        // Predicated region
        $region25: #{tpu_custom_call.1} parent=11 // pred_check
          %p176 = pneg %p105
        $region26: #{tpu_custom_call.1} parent=11 // pred_check_branch
          %178 = sbr.rel (%p176) target = $region28
        $region27: #{tpu_custom_call.1} parent=11 // pred_region
          _
        $region28: #{tpu_custom_call.1} parent=11 // pred_fallthru
          _
        // Predicated region
        $region29: #{tpu_custom_call.1} parent=11 // pred_check
          %p179 = pneg %p126
        $region30: #{tpu_custom_call.1} parent=11 // pred_check_branch
          %181 = sbr.rel (%p179) target = $region32
        $region31: #{tpu_custom_call.1} parent=11 // pred_region
          _
        $region32: #{tpu_custom_call.1} parent=11 // pred_fallthru
          _
      $region12: #{tpu_custom_call.1} parent=5 // pred_fallthru
        _
      %p182 = scmp.lt.s32.totalorder %s21, 2
      // Predicated region
      $region33: #{tpu_custom_call.1} parent=5 // pred_check
        %p183 = pneg %p182
      $region34: #{tpu_custom_call.1} parent=5 // pred_check_branch
        %185 = sbr.rel (%p183) target = $region36
      $region35: #{tpu_custom_call.1} parent=5 // pred_region
        _
      $region36: #{tpu_custom_call.1} parent=5 // pred_fallthru
        _
      %p186 = scmp.le.s32.totalorder 1, %s21
      %p187 = scmp.lt.s32.totalorder %s21, 3
      %p188 = pnand %p186, %p187
      %p189 = pneg %p188
      // Predicated region
      $region37: #{tpu_custom_call.1} parent=5 // pred_check
        _
      $region38: #{tpu_custom_call.1} parent=5 // pred_check_branch
        %191 = sbr.rel (%p188) target = $region40
      $region39: #{tpu_custom_call.1} parent=5 // pred_region
        %s192 = ssub.s32 %s21, 1
        %p193 = pneg %p42
        %p194 = pneg %p39
        %p195 = pneg %p63
        %p196 = pneg %p60
        %p197 = pneg %p84
        %p198 = pneg %p81
        %p199 = pneg %p105
        %p200 = pneg %p102
        %p201 = pneg %p126
        %p202 = pneg %p123
        %p203 = pneg %p152
        %p204 = pneg %p149
        %s205 = sand.u32 %s139, 1
        %s206 = scalar_lea.sflag [#allocation6], %s205
        %s207 = sand.u32 %s139, 1
        %s208 = smul.addr %s207, 8
        %s209 = scalar_lea.vmem [#allocation5], %s208
        %s211 = smul.u32 %s26, 8
        %s212 = smul.u32 %s211, 128
        %s213 = sld [smem:[#allocation4 + %s212]]
        %s214 = scalar_lea.vmem %s1, %s213
        %v215 = vld [vmem:[%s214] sm:$0x1]
        %vm216 = vcmask 253952
        %217 = vst.msk [vmem:[#allocation2] sm:$0x1] %vm216, %v215
        %s218 = sadd.s32 %s212, 1
        %s219 = sld [smem:[#allocation4 + %s218]]
        %s220 = sadd.s32 %s219, 257
        %s221 = scalar_lea.vmem %s1, %s220
        %v222 = vld [vmem:[%s221] sm:$0x1]
        %224 = vrot.lane.b32.xlu0 %v222, 32
        %v225 = vpop.permute.xlu0 %224
        %vm227 = vcmask 516352
        %228 = vst.msk [vmem:[#allocation2] sm:$0x1] %vm227, %v225
        %s229 = sadd.s32 %s212, 2
        %s230 = sld [smem:[#allocation4 + %s229]]
        %s231 = sadd.s32 %s230, 514
        %s232 = scalar_lea.vmem %s1, %s231
        %v233 = vld [vmem:[%s232] sm:$0x1]
        %235 = vrot.lane.b32.xlu0 %v233, 64
        %v236 = vpop.permute.xlu0 %235
        %vm238 = vcmask 778752
        %239 = vst.msk [vmem:[#allocation2] sm:$0x1] %vm238, %v236
        %s240 = sadd.s32 %s212, 3
        %s241 = sld [smem:[#allocation4 + %s240]]
        %s242 = sadd.s32 %s241, 771
        %s243 = scalar_lea.vmem %s1, %s242
        %v244 = vld [vmem:[%s243] sm:$0x1]
        %246 = vrot.lane.b32.xlu0 %v244, 96
        %v247 = vpop.permute.xlu0 %246
        %vm249 = vcmask 1041152
        %250 = vst.msk [vmem:[#allocation2] sm:$0x1] %vm249, %v247
        %s251 = sadd.s32 %s212, 4
        %s252 = sld [smem:[#allocation4 + %s251]]
        %s253 = sadd.s32 %s252, 1028
        %s254 = scalar_lea.vmem %s1, %s253
        %v255 = vld [vmem:[%s254] sm:$0x1]
        %256 = vst.msk [vmem:[#allocation2 + $0x8] sm:$0x1] %vm216, %v255
        %s257 = sadd.s32 %s212, 5
        %s258 = sld [smem:[#allocation4 + %s257]]
        %s259 = sadd.s32 %s258, 1285
        %s260 = scalar_lea.vmem %s1, %s259
        %v261 = vld [vmem:[%s260] sm:$0x1]
        %263 = vrot.lane.b32.xlu0 %v261, 32
        %v264 = vpop.permute.xlu0 %263
        %266 = vst.msk [vmem:[#allocation2 + $0x8] sm:$0x1] %vm227, %v264
        %s267 = sadd.s32 %s212, 6
        %s268 = sld [smem:[#allocation4 + %s267]]
        %s269 = sadd.s32 %s268, 1542
        %s270 = scalar_lea.vmem %s1, %s269
        %v271 = vld [vmem:[%s270] sm:$0x1]
        %273 = vrot.lane.b32.xlu0 %v271, 64
        %v274 = vpop.permute.xlu0 %273
        %276 = vst.msk [vmem:[#allocation2 + $0x8] sm:$0x1] %vm238, %v274
        %s277 = sadd.s32 %s211, 1
        %s278 = smul.u32 %s277, 128
        %s279 = sld [smem:[#allocation4 + %s278]]
        %s280 = scalar_lea.vmem %s1, %s279
        %v281 = vld [vmem:[%s280] sm:$0x1]
        %282 = vst.msk [vmem:[#allocation2 + $0x1] sm:$0x1] %vm216, %v281
        %s283 = sadd.s32 %s278, 1
        %s284 = sld [smem:[#allocation4 + %s283]]
        %s285 = sadd.s32 %s284, 257
        %s286 = scalar_lea.vmem %s1, %s285
        %v287 = vld [vmem:[%s286] sm:$0x1]
        %289 = vrot.lane.b32.xlu0 %v287, 32
        %v290 = vpop.permute.xlu0 %289
        %292 = vst.msk [vmem:[#allocation2 + $0x1] sm:$0x1] %vm227, %v290
        %s293 = sadd.s32 %s278, 2
        %s294 = sld [smem:[#allocation4 + %s293]]
        %s295 = sadd.s32 %s294, 514
        %s296 = scalar_lea.vmem %s1, %s295
        %v297 = vld [vmem:[%s296] sm:$0x1]
        %299 = vrot.lane.b32.xlu0 %v297, 64
        %v300 = vpop.permute.xlu0 %299
        %302 = vst.msk [vmem:[#allocation2 + $0x1] sm:$0x1] %vm238, %v300
        %s303 = sadd.s32 %s278, 3
        %s304 = sld [smem:[#allocation4 + %s303]]
        %s305 = sadd.s32 %s304, 771
        %s306 = scalar_lea.vmem %s1, %s305
        %v307 = vld [vmem:[%s306] sm:$0x1]
        %309 = vrot.lane.b32.xlu0 %v307, 96
        %v310 = vpop.permute.xlu0 %309
        %312 = vst.msk [vmem:[#allocation2 + $0x1] sm:$0x1] %vm249, %v310
        %s313 = sadd.s32 %s278, 4
        %s314 = sld [smem:[#allocation4 + %s313]]
        %s315 = sadd.s32 %s314, 1028
        %s316 = scalar_lea.vmem %s1, %s315
        %v317 = vld [vmem:[%s316] sm:$0x1]
        %318 = vst.msk [vmem:[#allocation2 + $0x9] sm:$0x1] %vm216, %v317
        %s319 = sadd.s32 %s278, 5
        %s320 = sld [smem:[#allocation4 + %s319]]
        %s321 = sadd.s32 %s320, 1285
        %s322 = scalar_lea.vmem %s1, %s321
        %v323 = vld [vmem:[%s322] sm:$0x1]
        %325 = vrot.lane.b32.xlu0 %v323, 32
        %v326 = vpop.permute.xlu0 %325
        %328 = vst.msk [vmem:[#allocation2 + $0x9] sm:$0x1] %vm227, %v326
        %s329 = sadd.s32 %s278, 6
        %s330 = sld [smem:[#allocation4 + %s329]]
        %s331 = sadd.s32 %s330, 1542
        %s332 = scalar_lea.vmem %s1, %s331
        %v333 = vld [vmem:[%s332] sm:$0x1]
        %335 = vrot.lane.b32.xlu0 %v333, 64
        %v336 = vpop.permute.xlu0 %335
        %338 = vst.msk [vmem:[#allocation2 + $0x9] sm:$0x1] %vm238, %v336
        %s339 = sadd.s32 %s211, 2
        %s340 = smul.u32 %s339, 128
        %s341 = sld [smem:[#allocation4 + %s340]]
        %s342 = scalar_lea.vmem %s1, %s341
        %v343 = vld [vmem:[%s342] sm:$0x1]
        %344 = vst.msk [vmem:[#allocation2 + $0x2] sm:$0x1] %vm216, %v343
        %s345 = sadd.s32 %s340, 1
        %s346 = sld [smem:[#allocation4 + %s345]]
        %s347 = sadd.s32 %s346, 257
        %s348 = scalar_lea.vmem %s1, %s347
        %v349 = vld [vmem:[%s348] sm:$0x1]
        %351 = vrot.lane.b32.xlu0 %v349, 32
        %v352 = vpop.permute.xlu0 %351
        %354 = vst.msk [vmem:[#allocation2 + $0x2] sm:$0x1] %vm227, %v352
        %s355 = sadd.s32 %s340, 2
        %s356 = sld [smem:[#allocation4 + %s355]]
        %s357 = sadd.s32 %s356, 514
        %s358 = scalar_lea.vmem %s1, %s357
        %v359 = vld [vmem:[%s358] sm:$0x1]
        %361 = vrot.lane.b32.xlu0 %v359, 64
        %v362 = vpop.permute.xlu0 %361
        %364 = vst.msk [vmem:[#allocation2 + $0x2] sm:$0x1] %vm238, %v362
        %s365 = sadd.s32 %s340, 3
        %s366 = sld [smem:[#allocation4 + %s365]]
        %s367 = sadd.s32 %s366, 771
        %s368 = scalar_lea.vmem %s1, %s367
        %v369 = vld [vmem:[%s368] sm:$0x1]
        %371 = vrot.lane.b32.xlu0 %v369, 96
        %v372 = vpop.permute.xlu0 %371
        %374 = vst.msk [vmem:[#allocation2 + $0x2] sm:$0x1] %vm249, %v372
        %s375 = sadd.s32 %s340, 4
        %s376 = sld [smem:[#allocation4 + %s375]]
        %s377 = sadd.s32 %s376, 1028
        %s378 = scalar_lea.vmem %s1, %s377
        %v379 = vld [vmem:[%s378] sm:$0x1]
        %380 = vst.msk [vmem:[#allocation2 + $0xa] sm:$0x1] %vm216, %v379
        %s381 = sadd.s32 %s340, 5
        %s382 = sld [smem:[#allocation4 + %s381]]
        %s383 = sadd.s32 %s382, 1285
        %s384 = scalar_lea.vmem %s1, %s383
        %v385 = vld [vmem:[%s384] sm:$0x1]
        %387 = vrot.lane.b32.xlu0 %v385, 32
        %v388 = vpop.permute.xlu0 %387
        %390 = vst.msk [vmem:[#allocation2 + $0xa] sm:$0x1] %vm227, %v388
        %s391 = sadd.s32 %s340, 6
        %s392 = sld [smem:[#allocation4 + %s391]]
        %s393 = sadd.s32 %s392, 1542
        %s394 = scalar_lea.vmem %s1, %s393
        %v395 = vld [vmem:[%s394] sm:$0x1]
        %397 = vrot.lane.b32.xlu0 %v395, 64
        %v398 = vpop.permute.xlu0 %397
        %400 = vst.msk [vmem:[#allocation2 + $0xa] sm:$0x1] %vm238, %v398
        %s401 = sadd.s32 %s211, 3
        %s402 = smul.u32 %s401, 128
        %s403 = sld [smem:[#allocation4 + %s402]]
        %s404 = scalar_lea.vmem %s1, %s403
        %v405 = vld [vmem:[%s404] sm:$0x1]
        %406 = vst.msk [vmem:[#allocation2 + $0x3] sm:$0x1] %vm216, %v405
        %s407 = sadd.s32 %s402, 1
        %s408 = sld [smem:[#allocation4 + %s407]]
        %s409 = sadd.s32 %s408, 257
        %s410 = scalar_lea.vmem %s1, %s409
        %v411 = vld [vmem:[%s410] sm:$0x1]
        %413 = vrot.lane.b32.xlu0 %v411, 32
        %v414 = vpop.permute.xlu0 %413
        %416 = vst.msk [vmem:[#allocation2 + $0x3] sm:$0x1] %vm227, %v414
        %s417 = sadd.s32 %s402, 2
        %s418 = sld [smem:[#allocation4 + %s417]]
        %s419 = sadd.s32 %s418, 514
        %s420 = scalar_lea.vmem %s1, %s419
        %v421 = vld [vmem:[%s420] sm:$0x1]
        %423 = vrot.lane.b32.xlu0 %v421, 64
        %v424 = vpop.permute.xlu0 %423
        %426 = vst.msk [vmem:[#allocation2 + $0x3] sm:$0x1] %vm238, %v424
        %s427 = sadd.s32 %s402, 3
        %s428 = sld [smem:[#allocation4 + %s427]]
        %s429 = sadd.s32 %s428, 771
        %s430 = scalar_lea.vmem %s1, %s429
        %v431 = vld [vmem:[%s430] sm:$0x1]
        %433 = vrot.lane.b32.xlu0 %v431, 96
        %v434 = vpop.permute.xlu0 %433
        %436 = vst.msk [vmem:[#allocation2 + $0x3] sm:$0x1] %vm249, %v434
        %s437 = sadd.s32 %s402, 4
        %s438 = sld [smem:[#allocation4 + %s437]]
        %s439 = sadd.s32 %s438, 1028
        %s440 = scalar_lea.vmem %s1, %s439
        %v441 = vld [vmem:[%s440] sm:$0x1]
        %442 = vst.msk [vmem:[#allocation2 + $0xb] sm:$0x1] %vm216, %v441
        %s443 = sadd.s32 %s402, 5
        %s444 = sld [smem:[#allocation4 + %s443]]
        %s445 = sadd.s32 %s444, 1285
        %s446 = scalar_lea.vmem %s1, %s445
        %v447 = vld [vmem:[%s446] sm:$0x1]
        %449 = vrot.lane.b32.xlu0 %v447, 32
        %v450 = vpop.permute.xlu0 %449
        %452 = vst.msk [vmem:[#allocation2 + $0xb] sm:$0x1] %vm227, %v450
        %s453 = sadd.s32 %s402, 6
        %s454 = sld [smem:[#allocation4 + %s453]]
        %s455 = sadd.s32 %s454, 1542
        %s456 = scalar_lea.vmem %s1, %s455
        %v457 = vld [vmem:[%s456] sm:$0x1]
        %459 = vrot.lane.b32.xlu0 %v457, 64
        %v460 = vpop.permute.xlu0 %459
        %462 = vst.msk [vmem:[#allocation2 + $0xb] sm:$0x1] %vm238, %v460
        %s463 = sadd.s32 %s211, 4
        %s464 = smul.u32 %s463, 128
        %s465 = sld [smem:[#allocation4 + %s464]]
        %s466 = scalar_lea.vmem %s1, %s465
        %v467 = vld [vmem:[%s466] sm:$0x1]
        %468 = vst.msk [vmem:[#allocation2 + $0x4] sm:$0x1] %vm216, %v467
        %s469 = sadd.s32 %s464, 1
        %s470 = sld [smem:[#allocation4 + %s469]]
        %s471 = sadd.s32 %s470, 257
        %s472 = scalar_lea.vmem %s1, %s471
        %v473 = vld [vmem:[%s472] sm:$0x1]
        %475 = vrot.lane.b32.xlu0 %v473, 32
        %v476 = vpop.permute.xlu0 %475
        %478 = vst.msk [vmem:[#allocation2 + $0x4] sm:$0x1] %vm227, %v476
        %s479 = sadd.s32 %s464, 2
        %s480 = sld [smem:[#allocation4 + %s479]]
        %s481 = sadd.s32 %s480, 514
        %s482 = scalar_lea.vmem %s1, %s481
        %v483 = vld [vmem:[%s482] sm:$0x1]
        %485 = vrot.lane.b32.xlu0 %v483, 64
        %v486 = vpop.permute.xlu0 %485
        %488 = vst.msk [vmem:[#allocation2 + $0x4] sm:$0x1] %vm238, %v486
        %s489 = sadd.s32 %s464, 3
        %s490 = sld [smem:[#allocation4 + %s489]]
        %s491 = sadd.s32 %s490, 771
        %s492 = scalar_lea.vmem %s1, %s491
        %v493 = vld [vmem:[%s492] sm:$0x1]
        %495 = vrot.lane.b32.xlu0 %v493, 96
        %v496 = vpop.permute.xlu0 %495
        %498 = vst.msk [vmem:[#allocation2 + $0x4] sm:$0x1] %vm249, %v496
        %s499 = sadd.s32 %s464, 4
        %s500 = sld [smem:[#allocation4 + %s499]]
        %s501 = sadd.s32 %s500, 1028
        %s502 = scalar_lea.vmem %s1, %s501
        %v503 = vld [vmem:[%s502] sm:$0x1]
        %504 = vst.msk [vmem:[#allocation2 + $0xc] sm:$0x1] %vm216, %v503
        %s505 = sadd.s32 %s464, 5
        %s506 = sld [smem:[#allocation4 + %s505]]
        %s507 = sadd.s32 %s506, 1285
        %s508 = scalar_lea.vmem %s1, %s507
        %v509 = vld [vmem:[%s508] sm:$0x1]
        %511 = vrot.lane.b32.xlu0 %v509, 32
        %v512 = vpop.permute.xlu0 %511
        %514 = vst.msk [vmem:[#allocation2 + $0xc] sm:$0x1] %vm227, %v512
        %s515 = sadd.s32 %s464, 6
        %s516 = sld [smem:[#allocation4 + %s515]]
        %s517 = sadd.s32 %s516, 1542
        %s518 = scalar_lea.vmem %s1, %s517
        %v519 = vld [vmem:[%s518] sm:$0x1]
        %521 = vrot.lane.b32.xlu0 %v519, 64
        %v522 = vpop.permute.xlu0 %521
        %524 = vst.msk [vmem:[#allocation2 + $0xc] sm:$0x1] %vm238, %v522
        %s525 = sadd.s32 %s211, 5
        %s526 = smul.u32 %s525, 128
        %s527 = sld [smem:[#allocation4 + %s526]]
        %s528 = scalar_lea.vmem %s1, %s527
        %v529 = vld [vmem:[%s528] sm:$0x1]
        %530 = vst.msk [vmem:[#allocation2 + $0x5] sm:$0x1] %vm216, %v529
        %s531 = sadd.s32 %s526, 1
        %s532 = sld [smem:[#allocation4 + %s531]]
        %s533 = sadd.s32 %s532, 257
        %s534 = scalar_lea.vmem %s1, %s533
        %v535 = vld [vmem:[%s534] sm:$0x1]
        %537 = vrot.lane.b32.xlu0 %v535, 32
        %v538 = vpop.permute.xlu0 %537
        %540 = vst.msk [vmem:[#allocation2 + $0x5] sm:$0x1] %vm227, %v538
        %s541 = sadd.s32 %s526, 2
        %s542 = sld [smem:[#allocation4 + %s541]]
        %s543 = sadd.s32 %s542, 514
        %s544 = scalar_lea.vmem %s1, %s543
        %v545 = vld [vmem:[%s544] sm:$0x1]
        %547 = vrot.lane.b32.xlu0 %v545, 64
        %v548 = vpop.permute.xlu0 %547
        %550 = vst.msk [vmem:[#allocation2 + $0x5] sm:$0x1] %vm238, %v548
        %s551 = sadd.s32 %s526, 3
        %s552 = sld [smem:[#allocation4 + %s551]]
        %s553 = sadd.s32 %s552, 771
        %s554 = scalar_lea.vmem %s1, %s553
        %v555 = vld [vmem:[%s554] sm:$0x1]
        %557 = vrot.lane.b32.xlu0 %v555, 96
        %v558 = vpop.permute.xlu0 %557
        %560 = vst.msk [vmem:[#allocation2 + $0x5] sm:$0x1] %vm249, %v558
        %s561 = sadd.s32 %s526, 4
        %s562 = sld [smem:[#allocation4 + %s561]]
        %s563 = sadd.s32 %s562, 1028
        %s564 = scalar_lea.vmem %s1, %s563
        %v565 = vld [vmem:[%s564] sm:$0x1]
        %566 = vst.msk [vmem:[#allocation2 + $0xd] sm:$0x1] %vm216, %v565
        %s567 = sadd.s32 %s526, 5
        %s568 = sld [smem:[#allocation4 + %s567]]
        %s569 = sadd.s32 %s568, 1285
        %s570 = scalar_lea.vmem %s1, %s569
        %v571 = vld [vmem:[%s570] sm:$0x1]
        %573 = vrot.lane.b32.xlu0 %v571, 32
        %v574 = vpop.permute.xlu0 %573
        %576 = vst.msk [vmem:[#allocation2 + $0xd] sm:$0x1] %vm227, %v574
        %s577 = sadd.s32 %s526, 6
        %s578 = sld [smem:[#allocation4 + %s577]]
        %s579 = sadd.s32 %s578, 1542
        %s580 = scalar_lea.vmem %s1, %s579
        %v581 = vld [vmem:[%s580] sm:$0x1]
        %583 = vrot.lane.b32.xlu0 %v581, 64
        %v584 = vpop.permute.xlu0 %583
        %586 = vst.msk [vmem:[#allocation2 + $0xd] sm:$0x1] %vm238, %v584
        %s587 = sadd.s32 %s211, 6
        %s588 = smul.u32 %s587, 128
        %s589 = sld [smem:[#allocation4 + %s588]]
        %s590 = scalar_lea.vmem %s1, %s589
        %v591 = vld [vmem:[%s590] sm:$0x1]
        %592 = vst.msk [vmem:[#allocation2 + $0x6] sm:$0x1] %vm216, %v591
        %s593 = sadd.s32 %s588, 1
        %s594 = sld [smem:[#allocation4 + %s593]]
        %s595 = sadd.s32 %s594, 257
        %s596 = scalar_lea.vmem %s1, %s595
        %v597 = vld [vmem:[%s596] sm:$0x1]
        %599 = vrot.lane.b32.xlu0 %v597, 32
        %v600 = vpop.permute.xlu0 %599
        %602 = vst.msk [vmem:[#allocation2 + $0x6] sm:$0x1] %vm227, %v600
        %s603 = sadd.s32 %s588, 2
        %s604 = sld [smem:[#allocation4 + %s603]]
        %s605 = sadd.s32 %s604, 514
        %s606 = scalar_lea.vmem %s1, %s605
        %v607 = vld [vmem:[%s606] sm:$0x1]
        %609 = vrot.lane.b32.xlu0 %v607, 64
        %v610 = vpop.permute.xlu0 %609
        %612 = vst.msk [vmem:[#allocation2 + $0x6] sm:$0x1] %vm238, %v610
        %s613 = sadd.s32 %s588, 3
        %s614 = sld [smem:[#allocation4 + %s613]]
        %s615 = sadd.s32 %s614, 771
        %s616 = scalar_lea.vmem %s1, %s615
        %v617 = vld [vmem:[%s616] sm:$0x1]
        %619 = vrot.lane.b32.xlu0 %v617, 96
        %v620 = vpop.permute.xlu0 %619
        %622 = vst.msk [vmem:[#allocation2 + $0x6] sm:$0x1] %vm249, %v620
        %s623 = sadd.s32 %s588, 4
        %s624 = sld [smem:[#allocation4 + %s623]]
        %s625 = sadd.s32 %s624, 1028
        %s626 = scalar_lea.vmem %s1, %s625
        %v627 = vld [vmem:[%s626] sm:$0x1]
        %628 = vst.msk [vmem:[#allocation2 + $0xe] sm:$0x1] %vm216, %v627
        %s629 = sadd.s32 %s588, 5
        %s630 = sld [smem:[#allocation4 + %s629]]
        %s631 = sadd.s32 %s630, 1285
        %s632 = scalar_lea.vmem %s1, %s631
        %v633 = vld [vmem:[%s632] sm:$0x1]
        %635 = vrot.lane.b32.xlu0 %v633, 32
        %v636 = vpop.permute.xlu0 %635
        %638 = vst.msk [vmem:[#allocation2 + $0xe] sm:$0x1] %vm227, %v636
        %s639 = sadd.s32 %s588, 6
        %s640 = sld [smem:[#allocation4 + %s639]]
        %s641 = sadd.s32 %s640, 1542
        %s642 = scalar_lea.vmem %s1, %s641
        %v643 = vld [vmem:[%s642] sm:$0x1]
        %645 = vrot.lane.b32.xlu0 %v643, 64
        %v646 = vpop.permute.xlu0 %645
        %648 = vst.msk [vmem:[#allocation2 + $0xe] sm:$0x1] %vm238, %v646
        %s649 = sadd.s32 %s211, 7
        %s650 = smul.u32 %s649, 128
        %s651 = sld [smem:[#allocation4 + %s650]]
        %s652 = scalar_lea.vmem %s1, %s651
        %v653 = vld [vmem:[%s652] sm:$0x1]
        %654 = vst.msk [vmem:[#allocation2 + $0x7] sm:$0x1] %vm216, %v653
        %s655 = sadd.s32 %s650, 1
        %s656 = sld [smem:[#allocation4 + %s655]]
        %s657 = sadd.s32 %s656, 257
        %s658 = scalar_lea.vmem %s1, %s657
        %v659 = vld [vmem:[%s658] sm:$0x1]
        %661 = vrot.lane.b32.xlu0 %v659, 32
        %v662 = vpop.permute.xlu0 %661
        %664 = vst.msk [vmem:[#allocation2 + $0x7] sm:$0x1] %vm227, %v662
        %s665 = sadd.s32 %s650, 2
        %s666 = sld [smem:[#allocation4 + %s665]]
        %s667 = sadd.s32 %s666, 514
        %s668 = scalar_lea.vmem %s1, %s667
        %v669 = vld [vmem:[%s668] sm:$0x1]
        %671 = vrot.lane.b32.xlu0 %v669, 64
        %v672 = vpop.permute.xlu0 %671
        %674 = vst.msk [vmem:[#allocation2 + $0x7] sm:$0x1] %vm238, %v672
        %s675 = sadd.s32 %s650, 3
        %s676 = sld [smem:[#allocation4 + %s675]]
        %s677 = sadd.s32 %s676, 771
        %s678 = scalar_lea.vmem %s1, %s677
        %v679 = vld [vmem:[%s678] sm:$0x1]
        %681 = vrot.lane.b32.xlu0 %v679, 96
        %v682 = vpop.permute.xlu0 %681
        %684 = vst.msk [vmem:[#allocation2 + $0x7] sm:$0x1] %vm249, %v682
        %s685 = sadd.s32 %s650, 4
        %s686 = sld [smem:[#allocation4 + %s685]]
        %s687 = sadd.s32 %s686, 1028
        %s688 = scalar_lea.vmem %s1, %s687
        %v689 = vld [vmem:[%s688] sm:$0x1]
        %690 = vst.msk [vmem:[#allocation2 + $0xf] sm:$0x1] %vm216, %v689
        %s691 = sadd.s32 %s650, 5
        %s692 = sld [smem:[#allocation4 + %s691]]
        %s693 = sadd.s32 %s692, 1285
        %s694 = scalar_lea.vmem %s1, %s693
        %v695 = vld [vmem:[%s694] sm:$0x1]
        %697 = vrot.lane.b32.xlu0 %v695, 32
        %v698 = vpop.permute.xlu0 %697
        %700 = vst.msk [vmem:[#allocation2 + $0xf] sm:$0x1] %vm227, %v698
        %s701 = sadd.s32 %s650, 6
        %s702 = sld [smem:[#allocation4 + %s701]]
        %s703 = sadd.s32 %s702, 1542
        %s704 = scalar_lea.vmem %s1, %s703
        %v705 = vld [vmem:[%s704] sm:$0x1]
        %707 = vrot.lane.b32.xlu0 %v705, 64
        %v708 = vpop.permute.xlu0 %707
        %710 = vst.msk [vmem:[#allocation2 + $0xf] sm:$0x1] %vm238, %v708
        %v711 = vld [vmem:[#allocation2] sm:$0xff]
        %v712 = vld [vmem:[#allocation2 + $0x8] sm:$0xff]
        %v713 = vpack.c.bf16 %v711, %v711
        %v714 = vpack.c.bf16 %v712, %v712
        %v715 = vld [vmem:[%s2] sm:$0xf]
        %v716 = vld [vmem:[%s2 + $0x4] sm:$0xf]
        %v717 = vld [vmem:[%s2 + $0x8] sm:$0xf]
        %v718 = vld [vmem:[%s2 + $0xc] sm:$0xf]
        %v719 = vld [vmem:[%s2 + $0x10] sm:$0xf]
        %v720 = vld [vmem:[%s2 + $0x14] sm:$0xf]
        %v721 = vld [vmem:[%s2 + $0x18] sm:$0xf]
        %v722 = vld [vmem:[%s2 + $0x1c] sm:$0xf]
        %v723 = vld [vmem:[%s2 + $0x20] sm:$0xf]
        %v724 = vld [vmem:[%s2 + $0x24] sm:$0xf]
        %v725 = vld [vmem:[%s2 + $0x28] sm:$0xf]
        %v726 = vld [vmem:[%s2 + $0x2c] sm:$0xf]
        %v727 = vld [vmem:[%s2 + $0x30] sm:$0xf]
        %v728 = vld [vmem:[%s2 + $0x34] sm:$0xf]
        %v729 = vld [vmem:[%s2 + $0x38] sm:$0xf]
        %v730 = vld [vmem:[%s2 + $0x3c] sm:$0xf]
        %v731 = vld [vmem:[%s2 + $0x40] sm:$0xf]
        %v732 = vld [vmem:[%s2 + $0x44] sm:$0xf]
        %v733 = vld [vmem:[%s2 + $0x48] sm:$0xf]
        %v734 = vld [vmem:[%s2 + $0x4c] sm:$0xf]
        %v735 = vld [vmem:[%s2 + $0x50] sm:$0xf]
        %v736 = vld [vmem:[%s2 + $0x54] sm:$0xf]
        %v737 = vld [vmem:[%s2 + $0x58] sm:$0xf]
        %v738 = vld [vmem:[%s2 + $0x5c] sm:$0xf]
        %v739 = vld [vmem:[%s2 + $0x60] sm:$0xf]
        %v740 = vld [vmem:[%s2 + $0x64] sm:$0xf]
        %v741 = vld [vmem:[%s2 + $0x68] sm:$0xf]
        %v742 = vld [vmem:[%s2 + $0x6c] sm:$0xf]
        %v743 = vld [vmem:[%s3] sm:$0x1]
        %v745 = vlaneseq
        %v746 = vshrl.u32 %v745, 7
        %v747 = vsub.s32 0, %v746
        %v748 = vrot.slane %v743, %v747
        %v778 = vunpack.c.l.b16 %v715
        %v779 = vunpack.c.l.b16 %v716
        %v780 = vunpack.c.l.b16 %v717
        %v781 = vunpack.c.l.b16 %v718
        %v782 = vunpack.c.l.b16 %v719
        %v783 = vunpack.c.l.b16 %v720
        %v784 = vunpack.c.l.b16 %v721
        %v785 = vunpack.c.l.b16 %v722
        %v786 = vunpack.c.l.b16 %v723
        %v787 = vunpack.c.l.b16 %v724
        %v788 = vunpack.c.l.b16 %v725
        %v789 = vunpack.c.l.b16 %v726
        %v790 = vunpack.c.l.b16 %v727
        %v791 = vunpack.c.l.b16 %v728
        %v792 = vunpack.c.l.b16 %v729
        %v793 = vunpack.c.l.b16 %v730
        %v794 = vunpack.c.l.b16 %v731
        %v795 = vunpack.c.l.b16 %v732
        %v796 = vunpack.c.l.b16 %v733
        %v797 = vunpack.c.l.b16 %v734
        %v798 = vunpack.c.l.b16 %v735
        %v799 = vunpack.c.l.b16 %v736
        %v800 = vunpack.c.l.b16 %v737
        %v801 = vunpack.c.l.b16 %v738
        %v802 = vunpack.c.l.b16 %v739
        %v803 = vunpack.c.l.b16 %v740
        %v804 = vunpack.c.l.b16 %v741
        %v805 = vunpack.c.l.b16 %v742
        %v806 = vpack.c.b16 %v779, %v778
        %v807 = vpack.c.b16 %v781, %v780
        %v808 = vpack.c.b16 %v783, %v782
        %v809 = vpack.c.b16 %v785, %v784
        %v810 = vpack.c.b16 %v787, %v786
        %v811 = vpack.c.b16 %v789, %v788
        %v812 = vpack.c.b16 %v791, %v790
        %v813 = vpack.c.b16 %v793, %v792
        %v814 = vpack.c.b16 %v795, %v794
        %v815 = vpack.c.b16 %v797, %v796
        %v816 = vpack.c.b16 %v799, %v798
        %v817 = vpack.c.b16 %v801, %v800
        %v818 = vpack.c.b16 %v803, %v802
        %v819 = vpack.c.b16 %v805, %v804
        %vm834 = vcmask 785408
        %v836 = vsel %vm834, %v714, 0
        %838 = vmatprep.subr.bf16.mxu0 0
        %839 = vmatpush1.bf16.msra.mxu0 %v813
        %840 = vmatprep.subr.bf16.mxu0 0
        %841 = vmatpush1.bf16.msra.mxu0 %v812
        %842 = vmatprep.subr.bf16.mxu0 0
        %843 = vmatpush1.bf16.msra.mxu0 %v811
        %844 = vmatprep.subr.bf16.mxu0 0
        %845 = vmatpush1.bf16.msra.mxu0 %v810
        %846 = vmatprep.subr.bf16.mxu0 0
        %847 = vmatpush1.bf16.msra.mxu0 %v809
        %848 = vmatprep.subr.bf16.mxu0 0
        %849 = vmatpush1.bf16.msra.mxu0 %v808
        %850 = vmatprep.subr.bf16.mxu0 0
        %851 = vmatpush1.bf16.msra.mxu0 %v807
        %852 = vmatprep.subr.bf16.mxu0 0
        %853 = vmatpush1.bf16.msra.mxu0 %v806
        %854 = vmatprep.subr.bf16.mxu0 0
        %855 = vmatpush2.bf16.msra.mxu0 0
        %856 = vmatprep.subr.bf16.mxu0 0
        %857 = vmatpush2.bf16.msra.mxu0 0
        %858 = vmatprep.subr.bf16.mxu0 0
        %859 = vmatpush2.bf16.msra.mxu0 %v819
        %860 = vmatprep.subr.bf16.mxu0 0
        %861 = vmatpush2.bf16.msra.mxu0 %v818
        %862 = vmatprep.subr.bf16.mxu0 0
        %863 = vmatpush2.bf16.msra.mxu0 %v817
        %864 = vmatprep.subr.bf16.mxu0 0
        %865 = vmatpush2.bf16.msra.mxu0 %v816
        %866 = vmatprep.subr.bf16.mxu0 0
        %867 = vmatpush2.bf16.msra.mxu0 %v815
        %868 = vmatprep.subr.bf16.mxu0 0
        %869 = vmatpush2.bf16.msra.mxu0 %v814
        %870 = vmatprep.mubr.bf16.mxu0 %v836
        %871 = vmatmul.mubr.bf16.gmra.mxu0 %v713
        %v872 = vpop.f32.mrf.mxu0
        %v873 = vadd.f32 %v748, %v872
        %v874 = vpop.f32.mrf.mxu0
        %v875 = vpop.f32.mrf.mxu0
        %v876 = vpop.f32.mrf.mxu0
        %877 = vdwg.mxu0
        %v878 = vxor.u32 %v873, 2147483648
        %v879 = vmul.f32 %v878, 1.442695
        %v880 = vpow.pop %v879
        %v881 = vadd.f32 %v880, 1.0
        %v882 = vrcp.pop %v881
        %v883 = vmul.f32 1.0, %v882
        %v884 = vmul.f32 %v873, %v883
        %v885 = vpack.c.bf16 %v884, %v884
        %v886 = vld [vmem:[%s4] sm:$0xf]
        %v887 = vld [vmem:[%s4 + $0x4] sm:$0xf]
        %v888 = vld [vmem:[%s4 + $0x8] sm:$0xf]
        %v889 = vld [vmem:[%s4 + $0xc] sm:$0xf]
        %v890 = vld [vmem:[%s4 + $0x10] sm:$0xf]
        %v891 = vld [vmem:[%s4 + $0x14] sm:$0xf]
        %v892 = vld [vmem:[%s4 + $0x18] sm:$0xf]
        %v893 = vld [vmem:[%s4 + $0x1c] sm:$0xf]
        %v894 = vld [vmem:[%s4 + $0x20] sm:$0xf]
        %v895 = vld [vmem:[%s4 + $0x24] sm:$0xf]
        %v896 = vld [vmem:[%s4 + $0x28] sm:$0xf]
        %v897 = vld [vmem:[%s4 + $0x2c] sm:$0xf]
        %v898 = vld [vmem:[%s4 + $0x30] sm:$0xf]
        %v899 = vld [vmem:[%s4 + $0x34] sm:$0xf]
        %v900 = vld [vmem:[%s4 + $0x38] sm:$0xf]
        %v901 = vld [vmem:[%s4 + $0x3c] sm:$0xf]
        %v902 = vld [vmem:[%s5] sm:$0x1]
        %v904 = vlaneseq
        %v905 = vshrl.u32 %v904, 7
        %v906 = vsub.s32 0, %v905
        %v907 = vrot.slane %v902, %v906
        %v925 = vunpack.c.l.b16 %v886
        %v926 = vunpack.c.l.b16 %v887
        %v927 = vunpack.c.l.b16 %v888
        %v928 = vunpack.c.l.b16 %v889
        %v929 = vunpack.c.l.b16 %v890
        %v930 = vunpack.c.l.b16 %v891
        %v931 = vunpack.c.l.b16 %v892
        %v932 = vunpack.c.l.b16 %v893
        %v933 = vunpack.c.l.b16 %v894
        %v934 = vunpack.c.l.b16 %v895
        %v935 = vunpack.c.l.b16 %v896
        %v936 = vunpack.c.l.b16 %v897
        %v937 = vunpack.c.l.b16 %v898
        %v938 = vunpack.c.l.b16 %v899
        %v939 = vunpack.c.l.b16 %v900
        %v940 = vunpack.c.l.b16 %v901
        %v941 = vpack.c.b16 %v926, %v925
        %v942 = vpack.c.b16 %v928, %v927
        %v943 = vpack.c.b16 %v930, %v929
        %v944 = vpack.c.b16 %v932, %v931
        %v945 = vpack.c.b16 %v934, %v933
        %v946 = vpack.c.b16 %v936, %v935
        %v947 = vpack.c.b16 %v938, %v937
        %v948 = vpack.c.b16 %v940, %v939
        %957 = vmatprep.subr.bf16.mxu0 0
        %958 = vmatpush1.bf16.msra.mxu0 %v948
        %959 = vmatprep.subr.bf16.mxu0 0
        %960 = vmatpush1.bf16.msra.mxu0 %v947
        %961 = vmatprep.subr.bf16.mxu0 0
        %962 = vmatpush1.bf16.msra.mxu0 %v946
        %963 = vmatprep.subr.bf16.mxu0 0
        %964 = vmatpush1.bf16.msra.mxu0 %v945
        %965 = vmatprep.subr.bf16.mxu0 0
        %966 = vmatpush1.bf16.msra.mxu0 %v944
        %967 = vmatprep.subr.bf16.mxu0 0
        %968 = vmatpush1.bf16.msra.mxu0 %v943
        %969 = vmatprep.subr.bf16.mxu0 0
        %970 = vmatpush1.bf16.msra.mxu0 %v942
        %971 = vmatprep.subr.bf16.mxu0 0
        %972 = vmatpush1.bf16.msra.mxu0 %v941
        %973 = vmatprep.subr.bf16.mxu0 0
        %974 = vmatpush2.bf16.msra.mxu0 0
        %975 = vmatprep.subr.bf16.mxu0 0
        %976 = vmatpush2.bf16.msra.mxu0 0
        %977 = vmatprep.subr.bf16.mxu0 0
        %978 = vmatpush2.bf16.msra.mxu0 0
        %979 = vmatprep.subr.bf16.mxu0 0
        %980 = vmatpush2.bf16.msra.mxu0 0
        %981 = vmatprep.subr.bf16.mxu0 0
        %982 = vmatpush2.bf16.msra.mxu0 0
        %983 = vmatprep.subr.bf16.mxu0 0
        %984 = vmatpush2.bf16.msra.mxu0 0
        %985 = vmatprep.subr.bf16.mxu0 0
        %986 = vmatpush2.bf16.msra.mxu0 0
        %987 = vmatprep.subr.bf16.mxu0 0
        %988 = vmatpush2.bf16.msra.mxu0 0
        %989 = vmatprep.mubr.bf16.mxu0 0
        %990 = vmatmul.mubr.bf16.gmra.mxu0 %v885
        %v991 = vpop.f32.mrf.mxu0
        %v992 = vadd.f32 %v907, %v991
        %v993 = vpop.f32.mrf.mxu0
        %v994 = vpop.f32.mrf.mxu0
        %v995 = vpop.f32.mrf.mxu0
        %996 = vdwg.mxu0
        %vm997 = vcmask 261120
        %998 = vst.msk [vmem:[%s209] sm:$0xff] %vm997, %v992
        %s999 = sand.u32 %s139, 1
        %s1000 = scalar_lea.sflag [#allocation6], %s999
        %s1001 = sand.u32 %s139, 1
        %s1002 = smul.addr %s1001, 8
        %s1003 = scalar_lea.vmem [#allocation5], %s1002
        // Predicated region
        $region41: #{tpu_custom_call.1} parent=39 // pred_check
          %p1004 = pneg %p149
        $region42: #{tpu_custom_call.1} parent=39 // pred_check_branch
          %1006 = sbr.rel (%p1004) target = $region44
        $region43: #{tpu_custom_call.1} parent=39 // pred_region
          %s1008 = ssub.s32 128, 128
          %1009 = vsyncadd %s1000, %s1008
          %s1010 = smul.addr %s26, 128
          %s1011 = scalar_lea.hbm %s6, %s1010
          %s1013 = sshll.u32 %s1003, 4
          %s1014 = int_to_ptr.vmem [resolvable:$true] %s1013
          %1016 = dma.vmem_to_hbm [thread:$0]  %s1014, 128, %s1011, %s1000
        $region44: #{tpu_custom_call.1} parent=39 // pred_fallthru
          _
      $region40: #{tpu_custom_call.1} parent=5 // pred_fallthru
        _
      %p1017 = scmp.le.s32.totalorder 2, %s21
      // Predicated region
      $region45: #{tpu_custom_call.1} parent=5 // pred_check
        %p1018 = pneg %p1017
      $region46: #{tpu_custom_call.1} parent=5 // pred_check_branch
        %1020 = sbr.rel (%p1018) target = $region48
      $region47: #{tpu_custom_call.1} parent=5 // pred_region
        %s1021 = ssub.s32 %s21, 2
        // Predicated region
        $region49: #{tpu_custom_call.1} parent=47 // pred_check
          %p1022 = pneg %p155
        $region50: #{tpu_custom_call.1} parent=47 // pred_check_branch
          %1024 = sbr.rel (%p1022) target = $region52
        $region51: #{tpu_custom_call.1} parent=47 // pred_region
          %s1025 = sand.u32 %s140, 1
          %s1026 = scalar_lea.sflag [#allocation6], %s1025
          %s1027 = sand.u32 %s140, 1
          %s1028 = smul.addr %s1027, 8
          %s1029 = scalar_lea.vmem [#allocation5], %s1028
          %1030 = dma.done %s1026, 128
        $region52: #{tpu_custom_call.1} parent=47 // pred_fallthru
          _
      $region48: #{tpu_custom_call.1} parent=5 // pred_fallthru
        _
    $region6: #{tpu_custom_call.1} parent=1 // loop_footer
      %s25 = sadd.s32 1, %s21
    $region7: #{tpu_custom_call.1} parent=1 // loop_footer_branch
      %20 = sbr.rel target = $region3
    $region8: #{tpu_custom_call.1} parent=1 // loop_exit
      _
    %1031 = vsyncpa [#allocation6], 1
    %s1032 = scalar_lea.sflag [#allocation6], 1
    %1033 = vsyncpa %s1032, 1

</llo_original>
